<compile_context>
chip_gen: v5e
topology: v5e:2x2
jax: 0.10.0
libtpu: 0.0.40
codegen_flags: <defaults>
</compile_context>

<pallas_src>
import jax
import jax.numpy as jnp
from jax import lax
from jax.experimental import pallas as pl
from jax.experimental.pallas import tpu as pltpu

BOARD_WIDTH = 16
PLANES = 32                      # ResBlock.in_planes == planes == out_planes
KSIZE = 5
PAD = 2
BN_EPS = 1e-5
KDIM = KSIZE * KSIZE * PLANES    # 800 = im2col contraction depth
ROW_TILE = 256                   # rows of the (N*H*W, KDIM) patch matrix per grid step
VMEM_LIMIT = 32 * 1024 * 1024    # explicit scoped-VMEM budget (safe on v5e/v6e/v7x)


# --------------------------------------------------------------------------
# Pallas kernels
# --------------------------------------------------------------------------

def conv_stats_kernel(p_ref, w_ref, y_ref, sum_ref, ssq_ref):
    """Pass 1 of one conv stage (grid over row tiles, axis 'arbitrary').

    p_ref   : (ROW_TILE, KDIM)  im2col patch tile (lane-dense, K=800)
    w_ref   : (KDIM, C)         reshaped conv weight (whole, resident)
    y_ref   : (ROW_TILE, C)     raw conv output tile
    sum_ref : (1, C)            resident per-channel sum accumulator
    ssq_ref : (1, C)            resident per-channel sum-of-squares accumulator
    """
    acc = jnp.dot(p_ref[...], w_ref[...], preferred_element_type=jnp.float32)

    @pl.when(pl.program_id(0) == 0)
    def _init():
        sum_ref[...] = jnp.zeros_like(sum_ref)
        ssq_ref[...] = jnp.zeros_like(ssq_ref)

    sum_ref[...] += jnp.sum(acc, axis=0, keepdims=True)
    ssq_ref[...] += jnp.sum(acc * acc, axis=0, keepdims=True)
    y_ref[...] = acc


def bn_relu_kernel(y_ref, sc_ref, sh_ref, o_ref):
    """Pass 2 (layer1): BN apply + ReLU on a lane-dense (rows, W*C) slab tile."""
    o_ref[...] = jnp.maximum(y_ref[...] * sc_ref[...] + sh_ref[...], 0.0)


def bn_add_relu_kernel(y_ref, sc_ref, sh_ref, r_ref, o_ref):
    """Pass 2 (layer2): BN apply + residual add + ReLU, lane-dense slab tile."""
    o_ref[...] = jnp.maximum(
        y_ref[...] * sc_ref[...] + sh_ref[...] + r_ref[...], 0.0)


# --------------------------------------------------------------------------
# pallas_call builders
# --------------------------------------------------------------------------

def _conv_with_stats(patches, w_mat):
    """conv as a single K=KDIM matmul per row tile; also returns batch sums."""
    n_rows, kdim = patches.shape
    cout = w_mat.shape[1]
    assert n_rows % ROW_TILE == 0, (n_rows, ROW_TILE)
    grid = (n_rows // ROW_TILE,)

    return pl.pallas_call(
        conv_stats_kernel,
        grid=grid,
        in_specs=[
            pl.BlockSpec((ROW_TILE, kdim), lambda i: (i, 0)),
            pl.BlockSpec((kdim, cout), lambda i: (0, 0)),
        ],
        out_specs=(
            pl.BlockSpec((ROW_TILE, cout), lambda i: (i, 0)),
            pl.BlockSpec((1, cout), lambda i: (0, 0)),
            pl.BlockSpec((1, cout), lambda i: (0, 0)),
        ),
        out_shape=(
            jax.ShapeDtypeStruct((n_rows, cout), jnp.float32),
            jax.ShapeDtypeStruct((1, cout), jnp.float32),
            jax.ShapeDtypeStruct((1, cout), jnp.float32),
        ),
        compiler_params=pltpu.CompilerParams(
            # resident sum/ssq accumulators -> sequential ("arbitrary") axis
            dimension_semantics=("arbitrary",),
            vmem_limit_bytes=VMEM_LIMIT),
    )(patches, w_mat)


def _bn_apply(y_raw, stat_sum, stat_ssq, gamma, beta, residual_slab=None):
    """Fold batch stats into per-channel scale/shift, then apply (+res)+ReLU
    on a lane-dense (N*H, W*C) slab with a 'parallel' batch grid."""
    n_rows, cout = y_raw.shape
    n_slab_rows = n_rows // BOARD_WIDTH          # N*H
    slab_width = BOARD_WIDTH * cout              # W*C = 512 lanes

    # Tiny (C,)-sized epilogue-parameter math (training-mode BN, biased var).
    mean = stat_sum[0] / n_rows
    var = stat_ssq[0] / n_rows - mean * mean
    scale = gamma * lax.rsqrt(var + BN_EPS)
    shift = beta - mean * scale
    scale_t = jnp.tile(scale, BOARD_WIDTH).reshape(1, slab_width)
    shift_t = jnp.tile(shift, BOARD_WIDTH).reshape(1, slab_width)

    # Free relayout: (N*H*W, C) and (N*H, W*C) are the same contiguous bytes.
    y_slab = y_raw.reshape(n_slab_rows, slab_width)

    row_tile = ROW_TILE // BOARD_WIDTH           # 16 slab rows per grid step
    assert n_slab_rows % row_tile == 0
    grid = (n_slab_rows // row_tile,)

    tile_spec = pl.BlockSpec((row_tile, slab_width), lambda i: (i, 0))
    vec_spec = pl.BlockSpec((1, slab_width), lambda i: (0, 0))

    if residual_slab is None:
        kernel = bn_relu_kernel
        operands = (y_slab, scale_t, shift_t)
        in_specs = [tile_spec, vec_spec, vec_spec]
    else:
        kernel = bn_add_relu_kernel
        operands = (y_slab, scale_t, shift_t, residual_slab)
        in_specs = [tile_spec, vec_spec, vec_spec, tile_spec]

    return pl.pallas_call(
        kernel,
        grid=grid,
        in_specs=in_specs,
        out_specs=tile_spec,
        out_shape=jax.ShapeDtypeStruct((n_slab_rows, slab_width), jnp.float32),
        compiler_params=pltpu.CompilerParams(
            dimension_semantics=("parallel",),   # shards across TCs on v7x
            vmem_limit_bytes=VMEM_LIMIT),
    )(*operands)


# --------------------------------------------------------------------------
# Wrapper glue (NCHW <-> NHWC, im2col, weight reshape)
# --------------------------------------------------------------------------

def _im2col(x_nhwc):
    """(N,H,W,C) -> (N*H*W, K*K*C) patches, tap-major / channel-minor columns."""
    n, h, w, c = x_nhwc.shape
    xp = jnp.pad(x_nhwc, ((0, 0), (PAD, PAD), (PAD, PAD), (0, 0)))
    taps = [xp[:, kh:kh + h, kw:kw + w, :]
            for kh in range(KSIZE) for kw in range(KSIZE)]
    patches = jnp.concatenate(taps, axis=-1)          # (N, H, W, K*K*C)
    return patches.reshape(n * h * w, KSIZE * KSIZE * c)


def _weight_to_mat(w_oihw):
    """OIHW -> (K*K*Cin, Cout), rows ordered (kh, kw, cin) to match _im2col."""
    cout, cin = w_oihw.shape[0], w_oihw.shape[1]
    return (jnp.transpose(w_oihw, (2, 3, 1, 0))
            .reshape(KSIZE * KSIZE * cin, cout)
            .astype(jnp.float32))


@jax.jit
def resblock_forward(x, w1, gamma1, beta1, w2, gamma2, beta2):
    """ResBlock.forward with training-mode (batch-statistics) BatchNorm."""
    # TODO(synk): BatchNorm running_mean/running_var buffer updates are a
    # training-time side effect and are not materialized here.
    x = x.astype(jnp.float32)
    n, c, h, w = x.shape
    x_nhwc = jnp.transpose(x, (0, 2, 3, 1))
    res_slab = x_nhwc.reshape(n * h, w * c)           # residual, lane-dense slab

    # ---- layer1: conv(5x5, pad=2, bias=False) -> BN -> ReLU ----
    p1 = _im2col(x_nhwc)
    y1_raw, s1, ss1 = _conv_with_stats(p1, _weight_to_mat(w1))
    y1_slab = _bn_apply(y1_raw, s1, ss1,
                        gamma1.astype(jnp.float32), beta1.astype(jnp.float32))

    # ---- layer2: conv(5x5, pad=2, bias=False) -> BN, + residual, ReLU ----
    y1_nhwc = y1_slab.reshape(n, h, w, c)
    p2 = _im2col(y1_nhwc)
    y2_raw, s2, ss2 = _conv_with_stats(p2, _weight_to_mat(w2))
    out_slab = _bn_apply(y2_raw, s2, ss2,
                         gamma2.astype(jnp.float32), beta2.astype(jnp.float32),
                         residual_slab=res_slab)

    out_nhwc = out_slab.reshape(n, h, w, c)
    return jnp.transpose(out_nhwc, (0, 3, 1, 2))      # back to NCHW (torch layout)


# --------------------------------------------------------------------------
# Pure-JAX reference (for validation)
# --------------------------------------------------------------------------

def reference_resblock(x, w1, gamma1, beta1, w2, gamma2, beta2):
    x = x.astype(jnp.float32)

    def conv_bn(h, wgt, gamma, beta):
        y = lax.conv_general_dilated(
            h, wgt.astype(jnp.float32), window_strides=(1, 1),
            padding=((PAD, PAD), (PAD, PAD)),
            dimension_numbers=("NCHW", "OIHW", "NCHW"))
        mean = jnp.mean(y, axis=(0, 2, 3), keepdims=True)
        var = jnp.mean((y - mean) ** 2, axis=(0, 2, 3), keepdims=True)
        y = (y - mean) * lax.rsqrt(var + BN_EPS)
        return y * gamma.reshape(1, -1, 1, 1) + beta.reshape(1, -1, 1, 1)

    out = jnp.maximum(conv_bn(x, w1, gamma1, beta1), 0.0)
    out = conv_bn(out, w2, gamma2, beta2)
    out = out + x
    return jnp.maximum(out, 0.0)


# --------------------------------------------------------------------------
# Self-test
# --------------------------------------------------------------------------

if __name__ == "__main__":
    key = jax.random.PRNGKey(0)
    kx, kw1, kw2, kg1, kb1, kg2, kb2 = jax.random.split(key, 7)

    N = 2
    x = jax.random.normal(kx, (N, PLANES, BOARD_WIDTH, BOARD_WIDTH), jnp.float32)
    w1 = jax.random.normal(kw1, (PLANES, PLANES, KSIZE, KSIZE), jnp.float32) * 0.05
    w2 = jax.random.normal(kw2, (PLANES, PLANES, KSIZE, KSIZE), jnp.float32) * 0.05
    gamma1 = 1.0 + 0.1 * jax.random.normal(kg1, (PLANES,), jnp.float32)
    beta1 = 0.1 * jax.random.normal(kb1, (PLANES,), jnp.float32)
    gamma2 = 1.0 + 0.1 * jax.random.normal(kg2, (PLANES,), jnp.float32)
    beta2 = 0.1 * jax.random.normal(kb2, (PLANES,), jnp.float32)

    out = jax.block_until_ready(
        resblock_forward(x, w1, gamma1, beta1, w2, gamma2, beta2))
    ref = jax.block_until_ready(
        reference_resblock(x, w1, gamma1, beta1, w2, gamma2, beta2))

    assert out.shape == (N, PLANES, BOARD_WIDTH, BOARD_WIDTH), out.shape
    max_err = float(jnp.max(jnp.abs(out - ref)))
    assert jnp.allclose(out, ref, atol=1e-3, rtol=1e-3), max_err

    print("KERNEL_OK")
</pallas_src>

<mosaic_0001>
module attributes {stable_mosaic.version = 11 : i64} {
  func.func @conv_stats_kernel(%arg0: i32, %arg1: memref<256x800xf32, #tpu.memory_space<vmem>>, %arg2: memref<800x32xf32, #tpu.memory_space<vmem>>, %arg3: memref<256x32xf32, #tpu.memory_space<vmem>>, %arg4: memref<1x32xf32, #tpu.memory_space<vmem>>, %arg5: memref<1x32xf32, #tpu.memory_space<vmem>>) attributes {dimension_semantics = [#tpu.dimension_semantics<arbitrary>], iteration_bounds = array<i64: 2>, scalar_prefetch = 0 : i64, scratch_operands = 0 : i64, tpu.core_type = #tpu.core_type<tc>, window_params = [{transform_indices = @transform_0, window_bounds = array<i64: 256, 800>}, {pipeline_mode = #tpu.pipeline_mode<synchronous>, transform_indices = @transform_1, window_bounds = array<i64: 800, 32>}, {transform_indices = @transform_2, window_bounds = array<i64: 256, 32>}, {pipeline_mode = #tpu.pipeline_mode<synchronous>, transform_indices = @transform_3, window_bounds = array<i64: 1, 32>}, {pipeline_mode = #tpu.pipeline_mode<synchronous>, transform_indices = @transform_4, window_bounds = array<i64: 1, 32>}]} {
    %c0 = arith.constant 0 : index
    %c0_0 = arith.constant 0 : index
    %0 = vector.load %arg1[%c0, %c0_0] : memref<256x800xf32, #tpu.memory_space<vmem>>, vector<256x800xf32>
    %c0_1 = arith.constant 0 : index
    %c0_2 = arith.constant 0 : index
    %1 = vector.load %arg2[%c0_1, %c0_2] : memref<800x32xf32, #tpu.memory_space<vmem>>, vector<800x32xf32>
    %cst = arith.constant dense<0.000000e+00> : vector<256x32xf32>
    %2 = tpu.matmul %0, %1, %cst {dimension_numbers = #tpu.dot_dimension_numbers<[1], [0], [0], [1], [0, 0, 1, 1], [], []>} : vector<256x800xf32>, vector<800x32xf32>, vector<256x32xf32> -> vector<256x32xf32>
    %c0_i32 = arith.constant 0 : i32
    %3 = arith.cmpi eq, %arg0, %c0_i32 : i32
    %4 = arith.extui %3 : i1 to i32
    %c0_i32_3 = arith.constant 0 : i32
    %5 = arith.cmpi ne, %4, %c0_i32_3 : i32
    scf.if %5 {
      %cst_16 = arith.constant 0.000000e+00 : f32
      %18 = vector.broadcast %cst_16 : f32 to vector<1x32xf32>
      %c0_17 = arith.constant 0 : index
      %c0_18 = arith.constant 0 : index
      %19 = vector.load %arg4[%c0_17, %c0_18] : memref<1x32xf32, #tpu.memory_space<vmem>>, vector<1x32xf32>
      tpu.vector_store %arg4[%c0_17, %c0_18], %18 {strides = array<i32>} : memref<1x32xf32, #tpu.memory_space<vmem>>, vector<1x32xf32>,
      %cst_19 = arith.constant 0.000000e+00 : f32
      %20 = vector.broadcast %cst_19 : f32 to vector<1x32xf32>
      %c0_20 = arith.constant 0 : index
      %c0_21 = arith.constant 0 : index
      %21 = vector.load %arg5[%c0_20, %c0_21] : memref<1x32xf32, #tpu.memory_space<vmem>>, vector<1x32xf32>
      tpu.vector_store %arg5[%c0_20, %c0_21], %20 {strides = array<i32>} : memref<1x32xf32, #tpu.memory_space<vmem>>, vector<1x32xf32>,
    } else {
    }
    %c0_4 = arith.constant 0 : index
    %c0_5 = arith.constant 0 : index
    %6 = vector.load %arg4[%c0_4, %c0_5] : memref<1x32xf32, #tpu.memory_space<vmem>>, vector<1x32xf32>
    %cst_6 = arith.constant dense<0.000000e+00> : vector<32xf32>
    %7 = vector.multi_reduction <add>, %2, %cst_6 [0] : vector<256x32xf32> to vector<32xf32>
    %8 = vector.shape_cast %7 : vector<32xf32> to vector<1x32xf32>
    %9 = arith.addf %6, %8 : vector<1x32xf32>
    %c0_7 = arith.constant 0 : index
    %c0_8 = arith.constant 0 : index
    %10 = vector.load %arg4[%c0_7, %c0_8] : memref<1x32xf32, #tpu.memory_space<vmem>>, vector<1x32xf32>
    tpu.vector_store %arg4[%c0_7, %c0_8], %9 {strides = array<i32>} : memref<1x32xf32, #tpu.memory_space<vmem>>, vector<1x32xf32>,
    %c0_9 = arith.constant 0 : index
    %c0_10 = arith.constant 0 : index
    %11 = vector.load %arg5[%c0_9, %c0_10] : memref<1x32xf32, #tpu.memory_space<vmem>>, vector<1x32xf32>
    %12 = arith.mulf %2, %2 : vector<256x32xf32>
    %cst_11 = arith.constant dense<0.000000e+00> : vector<32xf32>
    %13 = vector.multi_reduction <add>, %12, %cst_11 [0] : vector<256x32xf32> to vector<32xf32>
    %14 = vector.shape_cast %13 : vector<32xf32> to vector<1x32xf32>
    %15 = arith.addf %11, %14 : vector<1x32xf32>
    %c0_12 = arith.constant 0 : index
    %c0_13 = arith.constant 0 : index
    %16 = vector.load %arg5[%c0_12, %c0_13] : memref<1x32xf32, #tpu.memory_space<vmem>>, vector<1x32xf32>
    tpu.vector_store %arg5[%c0_12, %c0_13], %15 {strides = array<i32>} : memref<1x32xf32, #tpu.memory_space<vmem>>, vector<1x32xf32>,
    %c0_14 = arith.constant 0 : index
    %c0_15 = arith.constant 0 : index
    %17 = vector.load %arg3[%c0_14, %c0_15] : memref<256x32xf32, #tpu.memory_space<vmem>>, vector<256x32xf32>
    tpu.vector_store %arg3[%c0_14, %c0_15], %2 {strides = array<i32>} : memref<256x32xf32, #tpu.memory_space<vmem>>, vector<256x32xf32>,
    return
  }
  func.func @transform_0(%arg0: i32) -> (i32, i32) {
    %c0_i32 = arith.constant 0 : i32
    %c0_i32_0 = arith.constant 0 : i32
    return %arg0, %c0_i32 : i32, i32
  }
  func.func @transform_1(%arg0: i32) -> (i32, i32) {
    %c0_i32 = arith.constant 0 : i32
    %c0_i32_0 = arith.constant 0 : i32
    %c0_i32_1 = arith.constant 0 : i32
    return %c0_i32, %c0_i32_0 : i32, i32
  }
  func.func @transform_2(%arg0: i32) -> (i32, i32) {
    %c0_i32 = arith.constant 0 : i32
    %c0_i32_0 = arith.constant 0 : i32
    return %arg0, %c0_i32 : i32, i32
  }
  func.func @transform_3(%arg0: i32) -> (i32, i32) {
    %c0_i32 = arith.constant 0 : i32
    %c0_i32_0 = arith.constant 0 : i32
    %c0_i32_1 = arith.constant 0 : i32
    return %c0_i32, %c0_i32_0 : i32, i32
  }
  func.func @transform_4(%arg0: i32) -> (i32, i32) {
    %c0_i32 = arith.constant 0 : i32
    %c0_i32_0 = arith.constant 0 : i32
    %c0_i32_1 = arith.constant 0 : i32
    return %c0_i32, %c0_i32_0 : i32, i32
  }
}

module attributes {stable_mosaic.version = 11 : i64} {
  func.func @bn_relu_kernel(%arg0: i32, %arg1: memref<16x512xf32, #tpu.memory_space<vmem>>, %arg2: memref<1x512xf32, #tpu.memory_space<vmem>>, %arg3: memref<1x512xf32, #tpu.memory_space<vmem>>, %arg4: memref<16x512xf32, #tpu.memory_space<vmem>>) attributes {dimension_semantics = [#tpu.dimension_semantics<parallel>], iteration_bounds = array<i64: 2>, scalar_prefetch = 0 : i64, scratch_operands = 0 : i64, tpu.core_type = #tpu.core_type<tc>, window_params = [{transform_indices = @transform_0, window_bounds = array<i64: 16, 512>}, {pipeline_mode = #tpu.pipeline_mode<synchronous>, transform_indices = @transform_1, window_bounds = array<i64: 1, 512>}, {pipeline_mode = #tpu.pipeline_mode<synchronous>, transform_indices = @transform_2, window_bounds = array<i64: 1, 512>}, {transform_indices = @transform_3, window_bounds = array<i64: 16, 512>}]} {
    %c0 = arith.constant 0 : index
    %c0_0 = arith.constant 0 : index
    %0 = vector.load %arg1[%c0, %c0_0] : memref<16x512xf32, #tpu.memory_space<vmem>>, vector<16x512xf32>
    %c0_1 = arith.constant 0 : index
    %c0_2 = arith.constant 0 : index
    %1 = vector.load %arg2[%c0_1, %c0_2] : memref<1x512xf32, #tpu.memory_space<vmem>>, vector<1x512xf32>
    %2 = vector.broadcast %1 : vector<1x512xf32> to vector<16x512xf32>
    %3 = arith.mulf %0, %2 : vector<16x512xf32>
    %c0_3 = arith.constant 0 : index
    %c0_4 = arith.constant 0 : index
    %4 = vector.load %arg3[%c0_3, %c0_4] : memref<1x512xf32, #tpu.memory_space<vmem>>, vector<1x512xf32>
    %5 = vector.broadcast %4 : vector<1x512xf32> to vector<16x512xf32>
    %6 = arith.addf %3, %5 : vector<16x512xf32>
    %cst = arith.constant 0.000000e+00 : f32
    %7 = vector.broadcast %cst : f32 to vector<16x512xf32>
    %8 = arith.maximumf %6, %7 : vector<16x512xf32>
    %c0_5 = arith.constant 0 : index
    %c0_6 = arith.constant 0 : index
    %9 = vector.load %arg4[%c0_5, %c0_6] : memref<16x512xf32, #tpu.memory_space<vmem>>, vector<16x512xf32>
    tpu.vector_store %arg4[%c0_5, %c0_6], %8 {strides = array<i32>} : memref<16x512xf32, #tpu.memory_space<vmem>>, vector<16x512xf32>,
    return
  }
  func.func @transform_0(%arg0: i32) -> (i32, i32) {
    %c0_i32 = arith.constant 0 : i32
    %c0_i32_0 = arith.constant 0 : i32
    return %arg0, %c0_i32 : i32, i32
  }
  func.func @transform_1(%arg0: i32) -> (i32, i32) {
    %c0_i32 = arith.constant 0 : i32
    %c0_i32_0 = arith.constant 0 : i32
    %c0_i32_1 = arith.constant 0 : i32
    return %c0_i32, %c0_i32_0 : i32, i32
  }
  func.func @transform_2(%arg0: i32) -> (i32, i32) {
    %c0_i32 = arith.constant 0 : i32
    %c0_i32_0 = arith.constant 0 : i32
    %c0_i32_1 = arith.constant 0 : i32
    return %c0_i32, %c0_i32_0 : i32, i32
  }
  func.func @transform_3(%arg0: i32) -> (i32, i32) {
    %c0_i32 = arith.constant 0 : i32
    %c0_i32_0 = arith.constant 0 : i32
    return %arg0, %c0_i32 : i32, i32
  }
}

module attributes {stable_mosaic.version = 11 : i64} {
  func.func @bn_add_relu_kernel(%arg0: i32, %arg1: memref<16x512xf32, #tpu.memory_space<vmem>>, %arg2: memref<1x512xf32, #tpu.memory_space<vmem>>, %arg3: memref<1x512xf32, #tpu.memory_space<vmem>>, %arg4: memref<16x512xf32, #tpu.memory_space<vmem>>, %arg5: memref<16x512xf32, #tpu.memory_space<vmem>>) attributes {dimension_semantics = [#tpu.dimension_semantics<parallel>], iteration_bounds = array<i64: 2>, scalar_prefetch = 0 : i64, scratch_operands = 0 : i64, tpu.core_type = #tpu.core_type<tc>, window_params = [{transform_indices = @transform_0, window_bounds = array<i64: 16, 512>}, {pipeline_mode = #tpu.pipeline_mode<synchronous>, transform_indices = @transform_1, window_bounds = array<i64: 1, 512>}, {pipeline_mode = #tpu.pipeline_mode<synchronous>, transform_indices = @transform_2, window_bounds = array<i64: 1, 512>}, {transform_indices = @transform_3, window_bounds = array<i64: 16, 512>}, {transform_indices = @transform_4, window_bounds = array<i64: 16, 512>}]} {
    %c0 = arith.constant 0 : index
    %c0_0 = arith.constant 0 : index
    %0 = vector.load %arg1[%c0, %c0_0] : memref<16x512xf32, #tpu.memory_space<vmem>>, vector<16x512xf32>
    %c0_1 = arith.constant 0 : index
    %c0_2 = arith.constant 0 : index
    %1 = vector.load %arg2[%c0_1, %c0_2] : memref<1x512xf32, #tpu.memory_space<vmem>>, vector<1x512xf32>
    %2 = vector.broadcast %1 : vector<1x512xf32> to vector<16x512xf32>
    %3 = arith.mulf %0, %2 : vector<16x512xf32>
    %c0_3 = arith.constant 0 : index
    %c0_4 = arith.constant 0 : index
    %4 = vector.load %arg3[%c0_3, %c0_4] : memref<1x512xf32, #tpu.memory_space<vmem>>, vector<1x512xf32>
    %5 = vector.broadcast %4 : vector<1x512xf32> to vector<16x512xf32>
    %6 = arith.addf %3, %5 : vector<16x512xf32>
    %c0_5 = arith.constant 0 : index
    %c0_6 = arith.constant 0 : index
    %7 = vector.load %arg4[%c0_5, %c0_6] : memref<16x512xf32, #tpu.memory_space<vmem>>, vector<16x512xf32>
    %8 = arith.addf %6, %7 : vector<16x512xf32>
    %cst = arith.constant 0.000000e+00 : f32
    %9 = vector.broadcast %cst : f32 to vector<16x512xf32>
    %10 = arith.maximumf %8, %9 : vector<16x512xf32>
    %c0_7 = arith.constant 0 : index
    %c0_8 = arith.constant 0 : index
    %11 = vector.load %arg5[%c0_7, %c0_8] : memref<16x512xf32, #tpu.memory_space<vmem>>, vector<16x512xf32>
    tpu.vector_store %arg5[%c0_7, %c0_8], %10 {strides = array<i32>} : memref<16x512xf32, #tpu.memory_space<vmem>>, vector<16x512xf32>,
    return
  }
  func.func @transform_0(%arg0: i32) -> (i32, i32) {
    %c0_i32 = arith.constant 0 : i32
    %c0_i32_0 = arith.constant 0 : i32
    return %arg0, %c0_i32 : i32, i32
  }
  func.func @transform_1(%arg0: i32) -> (i32, i32) {
    %c0_i32 = arith.constant 0 : i32
    %c0_i32_0 = arith.constant 0 : i32
    %c0_i32_1 = arith.constant 0 : i32
    return %c0_i32, %c0_i32_0 : i32, i32
  }
  func.func @transform_2(%arg0: i32) -> (i32, i32) {
    %c0_i32 = arith.constant 0 : i32
    %c0_i32_0 = arith.constant 0 : i32
    %c0_i32_1 = arith.constant 0 : i32
    return %c0_i32, %c0_i32_0 : i32, i32
  }
  func.func @transform_3(%arg0: i32) -> (i32, i32) {
    %c0_i32 = arith.constant 0 : i32
    %c0_i32_0 = arith.constant 0 : i32
    return %arg0, %c0_i32 : i32, i32
  }
  func.func @transform_4(%arg0: i32) -> (i32, i32) {
    %c0_i32 = arith.constant 0 : i32
    %c0_i32_0 = arith.constant 0 : i32
    return %arg0, %c0_i32 : i32, i32
  }
}

</mosaic_0001>

<llo_original>
// kernel: tile.23
$region0: #{tile.23}
  #allocation0 [shape = 's32[1]{0}', space=sflag, size = 0x4, scoped, tag = 'scoped memory for tile.23']
  %s0 = inlined_call_operand.vmem [shape: f32[32], index: 0, kind: input, shape index: {}]
  %s1 = inlined_call_operand.vmem [shape: f32[16,32], index: 1, kind: output, shape index: {}]
  // Predicated region
  $region2: #{tile.23} parent=0 // pred_check
    _
  $region3: #{tile.23} parent=0 // pred_check_branch
    %3 = sbr.rel (0) target = $region5
  $region4: #{tile.23} parent=0 // pred_region
    _
  $region5: #{tile.23} parent=0 // pred_fallthru
    _
  %v4 = vld [vmem:[%s0] ss:$0 sm:$0xff]
  %5 = vst [vmem:[%s1] sm:$0xff] %v4
  %s6 = scalar_lea.vmem %s1, 8
  %7 = vst [vmem:[%s6] sm:$0xff] %v4

// kernel: tile.24
$region0: #{tile.24}
  %s0 = inlined_call_operand.vmem [shape: f32[16,32], index: 0, kind: input, shape index: {}]
  %s1 = inlined_call_operand.vmem [shape: f32[1,512], index: 1, kind: output, shape index: {}]
  $region1: #{tile.24} parent=0
    #allocation0 [shape = 'u8[16384]{0}', space=vmem, size = 0x4000, scoped, tag = 'scoped mem for output reshape']
    %v2 = vld [vmem:[%s0] ss:$4 sm:$0xf]
    %vm3 = vcmask 261120
    %4 = vst.msk [vmem:[#allocation0] ss:$8 sm:$0xf] %vm3, %v2
    %s5 = scalar_lea.vmem %s0, 3
    %v6 = vld [vmem:[%s5] ss:$4 sm:$0xf]
    %7 = vrot.lane.b32.xlu0 %v6, 96
    %v8 = vpop.permute.xlu0 %7
    %vm9 = vcmask 1048320
    %10 = vst.msk [vmem:[#allocation0] ss:$8 sm:$0xf] %vm9, %v8
    %s11 = scalar_lea.vmem %s0, 2
    %v12 = vld [vmem:[%s11] ss:$4 sm:$0xf]
    %13 = vrot.lane.b32.xlu0 %v12, 64
    %v14 = vpop.permute.xlu0 %13
    %vm15 = vcmask 785920
    %16 = vst.msk [vmem:[#allocation0] ss:$8 sm:$0xf] %vm15, %v14
    %s17 = scalar_lea.vmem %s0, 1
    %v18 = vld [vmem:[%s17] ss:$4 sm:$0xf]
    %19 = vrot.lane.b32.xlu0 %v18, 32
    %v20 = vpop.permute.xlu0 %19
    %vm21 = vcmask 523520
    %22 = vst.msk [vmem:[#allocation0] ss:$8 sm:$0xf] %vm21, %v20
    %s24 = ssub.s32 2, 1
    %v25 = vld [vmem:[#allocation0] sm:%s24]
    %s27 = ssub.s32 2, 1
    %28 = vst [vmem:[%s1] sm:%s27] %v25
    %s29 = scalar_lea.vmem [#allocation0], 8
    %v30 = vld [vmem:[%s29] sm:%s24]
    %s32 = ssub.s32 2, 1
    %s33 = scalar_lea.vmem %s1, 1
    %34 = vst [vmem:[%s33] sm:%s32] %v30
    %s35 = scalar_lea.vmem [#allocation0], 16
    %v36 = vld [vmem:[%s35] sm:%s24]
    %s38 = ssub.s32 2, 1
    %s39 = scalar_lea.vmem %s1, 2
    %40 = vst [vmem:[%s39] sm:%s38] %v36
    %s41 = scalar_lea.vmem [#allocation0], 24
    %v42 = vld [vmem:[%s41] sm:%s24]
    %s44 = ssub.s32 2, 1
    %s45 = scalar_lea.vmem %s1, 3
    %46 = vst [vmem:[%s45] sm:%s44] %v42

// kernel: resblock_forward.4
$region0: #{resblock_forward.4}
  #allocation0 [shape = 'u32[]', space=smem, size = 0x4, offset = 0x4, fixed_abs, tag = 'smem constant byte address 0x4 - core index']
  #allocation1 [shape = 'u32[72,128]{1,0:T(1,128)}', space=vmem, size = 0x9000, scoped, tag = 'internal scratch']
  %s0 = inlined_call_operand.vmem [shape: f32[512,800], index: 0, kind: input, shape index: {}]
  %s1 = inlined_call_operand.vmem [shape: f32[800,32], index: 1, kind: input, shape index: {}]
  %s2 = inlined_call_operand.vmem [shape: f32[512,32], index: 2, kind: output, shape index: {0}]
  %s3 = inlined_call_operand.vmem [shape: f32[1,32], index: 3, kind: output, shape index: {1}]
  %s4 = inlined_call_operand.vmem [shape: f32[1,32], index: 4, kind: output, shape index: {2}]
  %5 = xla_tuple %s2, %s3, %s4
  %s6 = sld [smem:[#allocation0]]
  $region61: #{resblock_forward.4} parent=0
    _
  %s8 = ssub.s32 1, %s6
  %s9 = scalar_select 0, %s8, %s6
  loop: start=0, step=1, limit=4
  $region2: #{resblock_forward.4} parent=0 // loop_pre_header
    _
  $region3: #{resblock_forward.4} parent=0 // loop_header
    %s11 = sphi 0, %s15
    %p12 = scmp.ge.s32.totalorder %s11, 4
    %s21 = sphi 0, %s23
    %s24 = sphi 0, %s21
    %s25 = sphi 0, %s24
    %s41 = sphi 0, %s25
    %s45 = sphi 0, %s45
    %s47 = sphi 0, %s45
    %s48 = sphi 0, %s47
    %s62 = sphi 0, %s48
    %s68 = sphi 0, %s70
    %s71 = sphi 0, %s68
    %s72 = sphi 0, %s71
    %s88 = sphi 0, %s72
    %s92 = sphi 0, %s92
    %s94 = sphi 0, %s92
    %s95 = sphi 0, %s94
    %s109 = sphi 0, %s95
    %s113 = sphi 0, %s113
    %s115 = sphi 0, %s113
    %s116 = sphi 0, %s115
    %s130 = sphi 0, %s116
  $region4: #{resblock_forward.4} parent=0 // loop_header_branch
    %14 = sbr.rel (%p12) target = $region8
  $region5: #{resblock_forward.4} parent=0 // loop_body
    %s16 = ssub.s32 %s11, 1
    %s17 = ssub.s32 %s11, 2
    %s18 = sadd.s32 %s11, 1
    %s19 = ssub.s32 %s11, %s18
    %p20 = scmp.eq.s32.totalorder %s19, 0
    %s22 = sadd.s32 %s21, 1
    %s23 = scalar_select %p20, %s21, %s22
    %p26 = pneg %p20
    %p27 = scmp.eq.s32.totalorder %s11, 1
    %p28 = por %p26, %p27
    %p29 = scmp.ne.s32.totalorder %s21, %s24
    %p30 = scmp.eq.s32.totalorder %s11, 0
    %p31 = por %p29, %p30
    %p32 = scmp.ne.s32.totalorder %s21, %s24
    %p33 = scmp.eq.s32.totalorder %s16, 1
    %p34 = por %p32, %p33
    %p35 = scmp.ne.s32.totalorder %s24, %s25
    %p36 = scmp.eq.s32.totalorder %s16, 0
    %p37 = por %p35, %p36
    %p38 = scmp.ne.s32.totalorder %s24, %s25
    %p39 = scmp.eq.s32.totalorder %s17, 1
    %p40 = por %p38, %p39
    %p42 = scmp.ne.s32.totalorder %s25, %s41
    %p43 = scmp.eq.s32.totalorder %s17, 0
    %p44 = por %p42, %p43
    %s46 = sadd.s32 %s45, 1
    %p49 = scmp.eq.s32.totalorder %s11, 1
    %p50 = scmp.ne.s32.totalorder %s45, %s47
    %p51 = scmp.eq.s32.totalorder %s11, 0
    %p52 = por %p50, %p51
    %p53 = scmp.ne.s32.totalorder %s45, %s47
    %p54 = scmp.eq.s32.totalorder %s16, 1
    %p55 = por %p53, %p54
    %p56 = scmp.ne.s32.totalorder %s47, %s48
    %p57 = scmp.eq.s32.totalorder %s16, 0
    %p58 = por %p56, %p57
    %p59 = scmp.ne.s32.totalorder %s47, %s48
    %p60 = scmp.eq.s32.totalorder %s17, 1
    %p61 = por %p59, %p60
    %p63 = scmp.ne.s32.totalorder %s48, %s62
    %p64 = scmp.eq.s32.totalorder %s17, 0
    %p65 = por %p63, %p64
    %s66 = ssub.s32 %s11, %s18
    %p67 = scmp.eq.s32.totalorder %s66, 0
    %s69 = sadd.s32 %s68, 1
    %s70 = scalar_select %p67, %s68, %s69
    %p73 = pneg %p67
    %p74 = scmp.eq.s32.totalorder %s11, 1
    %p75 = por %p73, %p74
    %p76 = scmp.ne.s32.totalorder %s68, %s71
    %p77 = scmp.eq.s32.totalorder %s11, 0
    %p78 = por %p76, %p77
    %p79 = scmp.ne.s32.totalorder %s68, %s71
    %p80 = scmp.eq.s32.totalorder %s16, 1
    %p81 = por %p79, %p80
    %p82 = scmp.ne.s32.totalorder %s71, %s72
    %p83 = scmp.eq.s32.totalorder %s16, 0
    %p84 = por %p82, %p83
    %p85 = scmp.ne.s32.totalorder %s71, %s72
    %p86 = scmp.eq.s32.totalorder %s17, 1
    %p87 = por %p85, %p86
    %p89 = scmp.ne.s32.totalorder %s72, %s88
    %p90 = scmp.eq.s32.totalorder %s17, 0
    %p91 = por %p89, %p90
    %s93 = sadd.s32 %s92, 1
    %p96 = scmp.eq.s32.totalorder %s11, 1
    %p97 = scmp.ne.s32.totalorder %s92, %s94
    %p98 = scmp.eq.s32.totalorder %s11, 0
    %p99 = por %p97, %p98
    %p100 = scmp.ne.s32.totalorder %s92, %s94
    %p101 = scmp.eq.s32.totalorder %s16, 1
    %p102 = por %p100, %p101
    %p103 = scmp.ne.s32.totalorder %s94, %s95
    %p104 = scmp.eq.s32.totalorder %s16, 0
    %p105 = por %p103, %p104
    %p106 = scmp.ne.s32.totalorder %s94, %s95
    %p107 = scmp.eq.s32.totalorder %s17, 1
    %p108 = por %p106, %p107
    %p110 = scmp.ne.s32.totalorder %s95, %s109
    %p111 = scmp.eq.s32.totalorder %s17, 0
    %p112 = por %p110, %p111
    %s114 = sadd.s32 %s113, 1
    %p117 = scmp.eq.s32.totalorder %s11, 1
    %p118 = scmp.ne.s32.totalorder %s113, %s115
    %p119 = scmp.eq.s32.totalorder %s11, 0
    %p120 = por %p118, %p119
    %p121 = scmp.ne.s32.totalorder %s113, %s115
    %p122 = scmp.eq.s32.totalorder %s16, 1
    %p123 = por %p121, %p122
    %p124 = scmp.ne.s32.totalorder %s115, %s116
    %p125 = scmp.eq.s32.totalorder %s16, 0
    %p126 = por %p124, %p125
    %p127 = scmp.ne.s32.totalorder %s115, %s116
    %p128 = scmp.eq.s32.totalorder %s17, 1
    %p129 = por %p127, %p128
    %p131 = scmp.ne.s32.totalorder %s116, %s130
    %p132 = scmp.eq.s32.totalorder %s17, 0
    %p133 = por %p131, %p132
    %p134 = scmp.le.s32.totalorder 1, %s11
    %p135 = scmp.lt.s32.totalorder %s11, 3
    %p136 = pnand %p134, %p135
    %p137 = pneg %p136
    // Predicated region
    $region9: #{resblock_forward.4} parent=5 // pred_check
      _
    $region10: #{resblock_forward.4} parent=5 // pred_check_branch
      %139 = sbr.rel (%p136) target = $region12
    $region11: #{resblock_forward.4} parent=5 // pred_region
      %s140 = ssub.s32 %s11, 1
      // Predicated region
      $region13: #{resblock_forward.4} parent=11 // pred_check
        %p141 = pneg %p58
      $region14: #{resblock_forward.4} parent=11 // pred_check_branch
        %143 = sbr.rel (%p141) target = $region16
      $region15: #{resblock_forward.4} parent=11 // pred_region
        _
      $region16: #{resblock_forward.4} parent=11 // pred_fallthru
        _
    $region12: #{resblock_forward.4} parent=5 // pred_fallthru
      _
    %p144 = scmp.lt.s32.totalorder %s11, 2
    // Predicated region
    $region17: #{resblock_forward.4} parent=5 // pred_check
      %p145 = pneg %p144
    $region18: #{resblock_forward.4} parent=5 // pred_check_branch
      %147 = sbr.rel (%p145) target = $region20
    $region19: #{resblock_forward.4} parent=5 // pred_region
      // Predicated region
      $region21: #{resblock_forward.4} parent=19 // pred_check
        %p148 = pneg %p31
      $region22: #{resblock_forward.4} parent=19 // pred_check_branch
        %150 = sbr.rel (%p148) target = $region24
      $region23: #{resblock_forward.4} parent=19 // pred_region
        %s151 = smul.u32 32, %s11
        %p152 = scmp.lt.s32.totalorder %s151, 63
        %s153 = scalar_select %p152, %s151, 63
        %s154 = smul.addr %s153, 7
        %s155 = smul.addr %s154, 8
        %s156 = scalar_lea.vmem %s0, %s155
        %s157 = smul.u32 32, %s11
      $region24: #{resblock_forward.4} parent=19 // pred_fallthru
        _
    $region20: #{resblock_forward.4} parent=5 // pred_fallthru
      _
    %p158 = scmp.le.s32.totalorder 1, %s11
    %p159 = scmp.lt.s32.totalorder %s11, 3
    %p160 = pnand %p158, %p159
    %p161 = pneg %p160
    // Predicated region
    $region25: #{resblock_forward.4} parent=5 // pred_check
      _
    $region26: #{resblock_forward.4} parent=5 // pred_check_branch
      %163 = sbr.rel (%p160) target = $region28
    $region27: #{resblock_forward.4} parent=5 // pred_region
      %s164 = ssub.s32 %s11, 1
      %s165 = smul.u32 32, %s16
      %p166 = scmp.lt.s32.totalorder %s165, 63
      %s167 = scalar_select %p166, %s165, 63
      %s168 = smul.addr %s167, 7
      %s169 = smul.addr %s168, 8
      %s170 = scalar_lea.vmem %s0, %s169
      %p171 = pneg %p37
      %p172 = pneg %p34
      %p173 = pneg %p58
      %p174 = pneg %p55
      %p175 = pneg %p84
      %p176 = pneg %p81
      %s177 = smul.u32 32, %s16
      %p178 = scmp.lt.s32.totalorder %s177, 63
      %s179 = scalar_select %p178, %s177, 63
      %s180 = smul.addr %s179, 8
      %s181 = scalar_lea.vmem %s2, %s180
      %p182 = pneg %p105
      %p183 = pneg %p102
      %p184 = pneg %p126
      %p185 = pneg %p123
      %s186 = smul.u32 32, %s16
      %p187 = scmp.lt.s32.totalorder %s186, 63
      %s188 = scalar_select %p187, %s186, 63
      %s189 = smul.addr %s188, 7
      %s190 = smul.addr %s189, 8
      %s191 = scalar_lea.vmem %s0, %s190
      %s192 = smul.u32 32, %s16
      %s193 = smul.u32 32, %s16
      %p194 = scmp.lt.s32.totalorder %s193, 63
      %s195 = scalar_select %p194, %s193, 63
      %s196 = smul.addr %s195, 8
      %s197 = scalar_lea.vmem %s2, %s196
      %s198 = smul.u32 32, %s16
      %v199 = vld [vmem:[%s191] sm:$0xff]
      %v200 = vld [vmem:[%s191 + $0x8] sm:$0xff]
      %v201 = vld [vmem:[%s191 + $0x10] sm:$0xff]
      %v202 = vld [vmem:[%s191 + $0x18] sm:$0xff]
      %v203 = vld [vmem:[%s191 + $0x20] sm:$0xff]
      %v204 = vld [vmem:[%s191 + $0x28] sm:$0xff]
      %v205 = vld [vmem:[%s191 + $0x30] sm:$0xff]
      %v206 = vld [vmem:[%s191 + $0x38] sm:$0xff]
      %v207 = vld [vmem:[%s191 + $0x40] sm:$0xff]
      %v208 = vld [vmem:[%s191 + $0x48] sm:$0xff]
      %v209 = vld [vmem:[%s191 + $0x50] sm:$0xff]
      %v210 = vld [vmem:[%s191 + $0x58] sm:$0xff]
      %v211 = vld [vmem:[%s191 + $0x60] sm:$0xff]
      %v212 = vld [vmem:[%s191 + $0x68] sm:$0xff]
      %v213 = vld [vmem:[%s191 + $0x70] sm:$0xff]
      %v214 = vld [vmem:[%s191 + $0x78] sm:$0xff]
      %v215 = vld [vmem:[%s191 + $0x80] sm:$0xff]
      %v216 = vld [vmem:[%s191 + $0x88] sm:$0xff]
      %v217 = vld [vmem:[%s191 + $0x90] sm:$0xff]
      %v218 = vld [vmem:[%s191 + $0x98] sm:$0xff]
      %v219 = vld [vmem:[%s191 + $0xa0] sm:$0xff]
      %v220 = vld [vmem:[%s191 + $0xa8] sm:$0xff]
      %v221 = vld [vmem:[%s191 + $0xb0] sm:$0xff]
      %v222 = vld [vmem:[%s191 + $0xb8] sm:$0xff]
      %v223 = vld [vmem:[%s191 + $0xc0] sm:$0xff]
      %v224 = vld [vmem:[%s191 + $0xc8] sm:$0xff]
      %v225 = vld [vmem:[%s191 + $0xd0] sm:$0xff]
      %v226 = vld [vmem:[%s191 + $0xd8] sm:$0xff]
      %v227 = vld [vmem:[%s191 + $0xe0] sm:$0xff]
      %v228 = vld [vmem:[%s191 + $0xe8] sm:$0xff]
      %v229 = vld [vmem:[%s191 + $0xf0] sm:$0xff]
      %v230 = vld [vmem:[%s191 + $0xf8] sm:$0xff]
      %v231 = vld [vmem:[%s191 + $0x100] sm:$0xff]
      %v232 = vld [vmem:[%s191 + $0x108] sm:$0xff]
      %v233 = vld [vmem:[%s191 + $0x110] sm:$0xff]
      %v234 = vld [vmem:[%s191 + $0x118] sm:$0xff]
      %v235 = vld [vmem:[%s191 + $0x120] sm:$0xff]
      %v236 = vld [vmem:[%s191 + $0x128] sm:$0xff]
      %v237 = vld [vmem:[%s191 + $0x130] sm:$0xff]
      %v238 = vld [vmem:[%s191 + $0x138] sm:$0xff]
      %v239 = vld [vmem:[%s191 + $0x140] sm:$0xff]
      %v240 = vld [vmem:[%s191 + $0x148] sm:$0xff]
      %v241 = vld [vmem:[%s191 + $0x150] sm:$0xff]
      %v242 = vld [vmem:[%s191 + $0x158] sm:$0xff]
      %v243 = vld [vmem:[%s191 + $0x160] sm:$0xff]
      %v244 = vld [vmem:[%s191 + $0x168] sm:$0xff]
      %v245 = vld [vmem:[%s191 + $0x170] sm:$0xff]
      %v246 = vld [vmem:[%s191 + $0x178] sm:$0xff]
      %v247 = vld [vmem:[%s191 + $0x180] sm:$0xff]
      %v248 = vld [vmem:[%s191 + $0x188] sm:$0xff]
      %v249 = vld [vmem:[%s191 + $0x190] sm:$0xff]
      %v250 = vld [vmem:[%s191 + $0x198] sm:$0xff]
      %v251 = vld [vmem:[%s191 + $0x1a0] sm:$0xff]
      %v252 = vld [vmem:[%s191 + $0x1a8] sm:$0xff]
      %v253 = vld [vmem:[%s191 + $0x1b0] sm:$0xff]
      %v254 = vld [vmem:[%s191 + $0x1b8] sm:$0xff]
      %v255 = vld [vmem:[%s191 + $0x1c0] sm:$0xff]
      %v256 = vld [vmem:[%s191 + $0x1c8] sm:$0xff]
      %v257 = vld [vmem:[%s191 + $0x1d0] sm:$0xff]
      %v258 = vld [vmem:[%s191 + $0x1d8] sm:$0xff]
      %v259 = vld [vmem:[%s191 + $0x1e0] sm:$0xff]
      %v260 = vld [vmem:[%s191 + $0x1e8] sm:$0xff]
      %v261 = vld [vmem:[%s191 + $0x1f0] sm:$0xff]
      %v262 = vld [vmem:[%s191 + $0x1f8] sm:$0xff]
      %v263 = vld [vmem:[%s191 + $0x200] sm:$0xff]
      %v264 = vld [vmem:[%s191 + $0x208] sm:$0xff]
      %v265 = vld [vmem:[%s191 + $0x210] sm:$0xff]
      %v266 = vld [vmem:[%s191 + $0x218] sm:$0xff]
      %v267 = vld [vmem:[%s191 + $0x220] sm:$0xff]
      %v268 = vld [vmem:[%s191 + $0x228] sm:$0xff]
      %v269 = vld [vmem:[%s191 + $0x230] sm:$0xff]
      %v270 = vld [vmem:[%s191 + $0x238] sm:$0xff]
      %v271 = vld [vmem:[%s191 + $0x240] sm:$0xff]
      %v272 = vld [vmem:[%s191 + $0x248] sm:$0xff]
      %v273 = vld [vmem:[%s191 + $0x250] sm:$0xff]
      %v274 = vld [vmem:[%s191 + $0x258] sm:$0xff]
      %v275 = vld [vmem:[%s191 + $0x260] sm:$0xff]
      %v276 = vld [vmem:[%s191 + $0x268] sm:$0xff]
      %v277 = vld [vmem:[%s191 + $0x270] sm:$0xff]
      %v278 = vld [vmem:[%s191 + $0x278] sm:$0xff]
      %v279 = vld [vmem:[%s191 + $0x280] sm:$0xff]
      %v280 = vld [vmem:[%s191 + $0x288] sm:$0xff]
      %v281 = vld [vmem:[%s191 + $0x290] sm:$0xff]
      %v282 = vld [vmem:[%s191 + $0x298] sm:$0xff]
      %v283 = vld [vmem:[%s191 + $0x2a0] sm:$0xff]
      %v284 = vld [vmem:[%s191 + $0x2a8] sm:$0xff]
      %v285 = vld [vmem:[%s191 + $0x2b0] sm:$0xff]
      %v286 = vld [vmem:[%s191 + $0x2b8] sm:$0xff]
      %v287 = vld [vmem:[%s191 + $0x2c0] sm:$0xff]
      %v288 = vld [vmem:[%s191 + $0x2c8] sm:$0xff]
      %v289 = vld [vmem:[%s191 + $0x2d0] sm:$0xff]
      %v290 = vld [vmem:[%s191 + $0x2d8] sm:$0xff]
      %v291 = vld [vmem:[%s191 + $0x2e0] sm:$0xff]
      %v292 = vld [vmem:[%s191 + $0x2e8] sm:$0xff]
      %v293 = vld [vmem:[%s191 + $0x2f0] sm:$0xff]
      %v294 = vld [vmem:[%s191 + $0x2f8] sm:$0xff]
      %v295 = vld [vmem:[%s191 + $0x300] sm:$0xff]
      %v296 = vld [vmem:[%s191 + $0x308] sm:$0xff]
      %v297 = vld [vmem:[%s191 + $0x310] sm:$0xff]
      %v298 = vld [vmem:[%s191 + $0x318] sm:$0xff]
      %v299 = vld [vmem:[%s191 + $0x320] sm:$0xff]
      %v300 = vld [vmem:[%s191 + $0x328] sm:$0xff]
      %v301 = vld [vmem:[%s191 + $0x330] sm:$0xff]
      %v302 = vld [vmem:[%s191 + $0x338] sm:$0xff]
      %v303 = vld [vmem:[%s191 + $0x340] sm:$0xff]
      %v304 = vld [vmem:[%s191 + $0x348] sm:$0xff]
      %v305 = vld [vmem:[%s191 + $0x350] sm:$0xff]
      %v306 = vld [vmem:[%s191 + $0x358] sm:$0xff]
      %v307 = vld [vmem:[%s191 + $0x360] sm:$0xff]
      %v308 = vld [vmem:[%s191 + $0x368] sm:$0xff]
      %v309 = vld [vmem:[%s191 + $0x370] sm:$0xff]
      %v310 = vld [vmem:[%s191 + $0x378] sm:$0xff]
      %v311 = vld [vmem:[%s191 + $0x380] sm:$0xff]
      %v312 = vld [vmem:[%s191 + $0x388] sm:$0xff]
      %v313 = vld [vmem:[%s191 + $0x390] sm:$0xff]
      %v314 = vld [vmem:[%s191 + $0x398] sm:$0xff]
      %v315 = vld [vmem:[%s191 + $0x3a0] sm:$0xff]
      %v316 = vld [vmem:[%s191 + $0x3a8] sm:$0xff]
      %v317 = vld [vmem:[%s191 + $0x3b0] sm:$0xff]
      %v318 = vld [vmem:[%s191 + $0x3b8] sm:$0xff]
      %v319 = vld [vmem:[%s191 + $0x3c0] sm:$0xff]
      %v320 = vld [vmem:[%s191 + $0x3c8] sm:$0xff]
      %v321 = vld [vmem:[%s191 + $0x3d0] sm:$0xff]
      %v322 = vld [vmem:[%s191 + $0x3d8] sm:$0xff]
      %v323 = vld [vmem:[%s191 + $0x3e0] sm:$0xff]
      %v324 = vld [vmem:[%s191 + $0x3e8] sm:$0xff]
      %v325 = vld [vmem:[%s191 + $0x3f0] sm:$0xff]
      %v326 = vld [vmem:[%s191 + $0x3f8] sm:$0xff]
      %v327 = vld [vmem:[%s191 + $0x400] sm:$0xff]
      %v328 = vld [vmem:[%s191 + $0x408] sm:$0xff]
      %v329 = vld [vmem:[%s191 + $0x410] sm:$0xff]
      %v330 = vld [vmem:[%s191 + $0x418] sm:$0xff]
      %v331 = vld [vmem:[%s191 + $0x420] sm:$0xff]
      %v332 = vld [vmem:[%s191 + $0x428] sm:$0xff]
      %v333 = vld [vmem:[%s191 + $0x430] sm:$0xff]
      %v334 = vld [vmem:[%s191 + $0x438] sm:$0xff]
      %v335 = vld [vmem:[%s191 + $0x440] sm:$0xff]
      %v336 = vld [vmem:[%s191 + $0x448] sm:$0xff]
      %v337 = vld [vmem:[%s191 + $0x450] sm:$0xff]
      %v338 = vld [vmem:[%s191 + $0x458] sm:$0xff]
      %v339 = vld [vmem:[%s191 + $0x460] sm:$0xff]
      %v340 = vld [vmem:[%s191 + $0x468] sm:$0xff]
      %v341 = vld [vmem:[%s191 + $0x470] sm:$0xff]
      %v342 = vld [vmem:[%s191 + $0x478] sm:$0xff]
      %v343 = vld [vmem:[%s191 + $0x480] sm:$0xff]
      %v344 = vld [vmem:[%s191 + $0x488] sm:$0xff]
      %v345 = vld [vmem:[%s191 + $0x490] sm:$0xff]
      %v346 = vld [vmem:[%s191 + $0x498] sm:$0xff]
      %v347 = vld [vmem:[%s191 + $0x4a0] sm:$0xff]
      %v348 = vld [vmem:[%s191 + $0x4a8] sm:$0xff]
      %v349 = vld [vmem:[%s191 + $0x4b0] sm:$0xff]
      %v350 = vld [vmem:[%s191 + $0x4b8] sm:$0xff]
      %v351 = vld [vmem:[%s191 + $0x4c0] sm:$0xff]
      %v352 = vld [vmem:[%s191 + $0x4c8] sm:$0xff]
      %v353 = vld [vmem:[%s191 + $0x4d0] sm:$0xff]
      %v354 = vld [vmem:[%s191 + $0x4d8] sm:$0xff]
      %v355 = vld [vmem:[%s191 + $0x4e0] sm:$0xff]
      %v356 = vld [vmem:[%s191 + $0x4e8] sm:$0xff]
      %v357 = vld [vmem:[%s191 + $0x4f0] sm:$0xff]
      %v358 = vld [vmem:[%s191 + $0x4f8] sm:$0xff]
      %v359 = vld [vmem:[%s191 + $0x500] sm:$0xff]
      %v360 = vld [vmem:[%s191 + $0x508] sm:$0xff]
      %v361 = vld [vmem:[%s191 + $0x510] sm:$0xff]
      %v362 = vld [vmem:[%s191 + $0x518] sm:$0xff]
      %v363 = vld [vmem:[%s191 + $0x520] sm:$0xff]
      %v364 = vld [vmem:[%s191 + $0x528] sm:$0xff]
      %v365 = vld [vmem:[%s191 + $0x530] sm:$0xff]
      %v366 = vld [vmem:[%s191 + $0x538] sm:$0xff]
      %v367 = vld [vmem:[%s191 + $0x540] sm:$0xff]
      %v368 = vld [vmem:[%s191 + $0x548] sm:$0xff]
      %v369 = vld [vmem:[%s191 + $0x550] sm:$0xff]
      %v370 = vld [vmem:[%s191 + $0x558] sm:$0xff]
      %v371 = vld [vmem:[%s191 + $0x560] sm:$0xff]
      %v372 = vld [vmem:[%s191 + $0x568] sm:$0xff]
      %v373 = vld [vmem:[%s191 + $0x570] sm:$0xff]
      %v374 = vld [vmem:[%s191 + $0x578] sm:$0xff]
      %v375 = vld [vmem:[%s191 + $0x580] sm:$0xff]
      %v376 = vld [vmem:[%s191 + $0x588] sm:$0xff]
      %v377 = vld [vmem:[%s191 + $0x590] sm:$0xff]
      %v378 = vld [vmem:[%s191 + $0x598] sm:$0xff]
      %v379 = vld [vmem:[%s191 + $0x5a0] sm:$0xff]
      %v380 = vld [vmem:[%s191 + $0x5a8] sm:$0xff]
      %v381 = vld [vmem:[%s191 + $0x5b0] sm:$0xff]
      %v382 = vld [vmem:[%s191 + $0x5b8] sm:$0xff]
      %v383 = vld [vmem:[%s191 + $0x5c0] sm:$0xff]
      %v384 = vld [vmem:[%s191 + $0x5c8] sm:$0xff]
      %v385 = vld [vmem:[%s191 + $0x5d0] sm:$0xff]
      %v386 = vld [vmem:[%s191 + $0x5d8] sm:$0xff]
      %v387 = vld [vmem:[%s191 + $0x5e0] sm:$0xff]
      %v388 = vld [vmem:[%s191 + $0x5e8] sm:$0xff]
      %v389 = vld [vmem:[%s191 + $0x5f0] sm:$0xff]
      %v390 = vld [vmem:[%s191 + $0x5f8] sm:$0xff]
      %v391 = vld [vmem:[%s191 + $0x600] sm:$0xff]
      %v392 = vld [vmem:[%s191 + $0x608] sm:$0xff]
      %v393 = vld [vmem:[%s191 + $0x610] sm:$0xff]
      %v394 = vld [vmem:[%s191 + $0x618] sm:$0xff]
      %v395 = vld [vmem:[%s191 + $0x620] sm:$0xff]
      %v396 = vld [vmem:[%s191 + $0x628] sm:$0xff]
      %v397 = vld [vmem:[%s191 + $0x630] sm:$0xff]
      %v398 = vld [vmem:[%s191 + $0x638] sm:$0xff]
      %v399 = vld [vmem:[%s191 + $0x640] sm:$0xff]
      %v400 = vld [vmem:[%s191 + $0x648] sm:$0xff]
      %v401 = vld [vmem:[%s191 + $0x650] sm:$0xff]
      %v402 = vld [vmem:[%s191 + $0x658] sm:$0xff]
      %v403 = vld [vmem:[%s191 + $0x660] sm:$0xff]
      %v404 = vld [vmem:[%s191 + $0x668] sm:$0xff]
      %v405 = vld [vmem:[%s191 + $0x670] sm:$0xff]
      %v406 = vld [vmem:[%s191 + $0x678] sm:$0xff]
      %v407 = vld [vmem:[%s191 + $0x680] sm:$0xff]
      %v408 = vld [vmem:[%s191 + $0x688] sm:$0xff]
      %v409 = vld [vmem:[%s191 + $0x690] sm:$0xff]
      %v410 = vld [vmem:[%s191 + $0x698] sm:$0xff]
      %v411 = vld [vmem:[%s191 + $0x6a0] sm:$0xff]
      %v412 = vld [vmem:[%s191 + $0x6a8] sm:$0xff]
      %v413 = vld [vmem:[%s191 + $0x6b0] sm:$0xff]
      %v414 = vld [vmem:[%s191 + $0x6b8] sm:$0xff]
      %v415 = vld [vmem:[%s191 + $0x6c0] sm:$0xff]
      %v416 = vld [vmem:[%s191 + $0x6c8] sm:$0xff]
      %v417 = vld [vmem:[%s191 + $0x6d0] sm:$0xff]
      %v418 = vld [vmem:[%s191 + $0x6d8] sm:$0xff]
      %v419 = vld [vmem:[%s191 + $0x6e0] sm:$0xff]
      %v420 = vld [vmem:[%s191 + $0x6e8] sm:$0xff]
      %v421 = vld [vmem:[%s191 + $0x6f0] sm:$0xff]
      %v422 = vld [vmem:[%s191 + $0x6f8] sm:$0xff]
      %v423 = vld [vmem:[%s1] sm:$0xff]
      %v424 = vld [vmem:[%s1 + $0x8] sm:$0xff]
      %v425 = vld [vmem:[%s1 + $0x10] sm:$0xff]
      %v426 = vld [vmem:[%s1 + $0x18] sm:$0xff]
      %v427 = vld [vmem:[%s1 + $0x20] sm:$0xff]
      %v428 = vld [vmem:[%s1 + $0x28] sm:$0xff]
      %v429 = vld [vmem:[%s1 + $0x30] sm:$0xff]
      %v430 = vld [vmem:[%s1 + $0x38] sm:$0xff]
      %v431 = vld [vmem:[%s1 + $0x40] sm:$0xff]
      %v432 = vld [vmem:[%s1 + $0x48] sm:$0xff]
      %v433 = vld [vmem:[%s1 + $0x50] sm:$0xff]
      %v434 = vld [vmem:[%s1 + $0x58] sm:$0xff]
      %v435 = vld [vmem:[%s1 + $0x60] sm:$0xff]
      %v436 = vld [vmem:[%s1 + $0x68] sm:$0xff]
      %v437 = vld [vmem:[%s1 + $0x70] sm:$0xff]
      %v438 = vld [vmem:[%s1 + $0x78] sm:$0xff]
      %v439 = vld [vmem:[%s1 + $0x80] sm:$0xff]
      %v440 = vld [vmem:[%s1 + $0x88] sm:$0xff]
      %v441 = vld [vmem:[%s1 + $0x90] sm:$0xff]
      %v442 = vld [vmem:[%s1 + $0x98] sm:$0xff]
      %v443 = vld [vmem:[%s1 + $0xa0] sm:$0xff]
      %v444 = vld [vmem:[%s1 + $0xa8] sm:$0xff]
      %v445 = vld [vmem:[%s1 + $0xb0] sm:$0xff]
      %v446 = vld [vmem:[%s1 + $0xb8] sm:$0xff]
      %v447 = vld [vmem:[%s1 + $0xc0] sm:$0xff]
      %v448 = vld [vmem:[%s1 + $0xc8] sm:$0xff]
      %v449 = vld [vmem:[%s1 + $0xd0] sm:$0xff]
      %v450 = vld [vmem:[%s1 + $0xd8] sm:$0xff]
      %v451 = vld [vmem:[%s1 + $0xe0] sm:$0xff]
      %v452 = vld [vmem:[%s1 + $0xe8] sm:$0xff]
      %v453 = vld [vmem:[%s1 + $0xf0] sm:$0xff]
      %v454 = vld [vmem:[%s1 + $0xf8] sm:$0xff]
      %v455 = vld [vmem:[%s1 + $0x100] sm:$0xff]
      %v456 = vld [vmem:[%s1 + $0x108] sm:$0xff]
      %v457 = vld [vmem:[%s1 + $0x110] sm:$0xff]
      %v458 = vld [vmem:[%s1 + $0x118] sm:$0xff]
      %v459 = vld [vmem:[%s1 + $0x120] sm:$0xff]
      %v460 = vld [vmem:[%s1 + $0x128] sm:$0xff]
      %v461 = vld [vmem:[%s1 + $0x130] sm:$0xff]
      %v462 = vld [vmem:[%s1 + $0x138] sm:$0xff]
      %v463 = vld [vmem:[%s1 + $0x140] sm:$0xff]
      %v464 = vld [vmem:[%s1 + $0x148] sm:$0xff]
      %v465 = vld [vmem:[%s1 + $0x150] sm:$0xff]
      %v466 = vld [vmem:[%s1 + $0x158] sm:$0xff]
      %v467 = vld [vmem:[%s1 + $0x160] sm:$0xff]
      %v468 = vld [vmem:[%s1 + $0x168] sm:$0xff]
      %v469 = vld [vmem:[%s1 + $0x170] sm:$0xff]
      %v470 = vld [vmem:[%s1 + $0x178] sm:$0xff]
      %v471 = vld [vmem:[%s1 + $0x180] sm:$0xff]
      %v472 = vld [vmem:[%s1 + $0x188] sm:$0xff]
      %v473 = vld [vmem:[%s1 + $0x190] sm:$0xff]
      %v474 = vld [vmem:[%s1 + $0x198] sm:$0xff]
      %v475 = vld [vmem:[%s1 + $0x1a0] sm:$0xff]
      %v476 = vld [vmem:[%s1 + $0x1a8] sm:$0xff]
      %v477 = vld [vmem:[%s1 + $0x1b0] sm:$0xff]
      %v478 = vld [vmem:[%s1 + $0x1b8] sm:$0xff]
      %v479 = vld [vmem:[%s1 + $0x1c0] sm:$0xff]
      %v480 = vld [vmem:[%s1 + $0x1c8] sm:$0xff]
      %v481 = vld [vmem:[%s1 + $0x1d0] sm:$0xff]
      %v482 = vld [vmem:[%s1 + $0x1d8] sm:$0xff]
      %v483 = vld [vmem:[%s1 + $0x1e0] sm:$0xff]
      %v484 = vld [vmem:[%s1 + $0x1e8] sm:$0xff]
      %v485 = vld [vmem:[%s1 + $0x1f0] sm:$0xff]
      %v486 = vld [vmem:[%s1 + $0x1f8] sm:$0xff]
      %v487 = vld [vmem:[%s1 + $0x200] sm:$0xff]
      %v488 = vld [vmem:[%s1 + $0x208] sm:$0xff]
      %v489 = vld [vmem:[%s1 + $0x210] sm:$0xff]
      %v490 = vld [vmem:[%s1 + $0x218] sm:$0xff]
      %v491 = vld [vmem:[%s1 + $0x220] sm:$0xff]
      %v492 = vld [vmem:[%s1 + $0x228] sm:$0xff]
      %v493 = vld [vmem:[%s1 + $0x230] sm:$0xff]
      %v494 = vld [vmem:[%s1 + $0x238] sm:$0xff]
      %v495 = vld [vmem:[%s1 + $0x240] sm:$0xff]
      %v496 = vld [vmem:[%s1 + $0x248] sm:$0xff]
      %v497 = vld [vmem:[%s1 + $0x250] sm:$0xff]
      %v498 = vld [vmem:[%s1 + $0x258] sm:$0xff]
      %v499 = vld [vmem:[%s1 + $0x260] sm:$0xff]
      %v500 = vld [vmem:[%s1 + $0x268] sm:$0xff]
      %v501 = vld [vmem:[%s1 + $0x270] sm:$0xff]
      %v502 = vld [vmem:[%s1 + $0x278] sm:$0xff]
      %v503 = vld [vmem:[%s1 + $0x280] sm:$0xff]
      %v504 = vld [vmem:[%s1 + $0x288] sm:$0xff]
      %v505 = vld [vmem:[%s1 + $0x290] sm:$0xff]
      %v506 = vld [vmem:[%s1 + $0x298] sm:$0xff]
      %v507 = vld [vmem:[%s1 + $0x2a0] sm:$0xff]
      %v508 = vld [vmem:[%s1 + $0x2a8] sm:$0xff]
      %v509 = vld [vmem:[%s1 + $0x2b0] sm:$0xff]
      %v510 = vld [vmem:[%s1 + $0x2b8] sm:$0xff]
      %v511 = vld [vmem:[%s1 + $0x2c0] sm:$0xff]
      %v512 = vld [vmem:[%s1 + $0x2c8] sm:$0xff]
      %v513 = vld [vmem:[%s1 + $0x2d0] sm:$0xff]
      %v514 = vld [vmem:[%s1 + $0x2d8] sm:$0xff]
      %v515 = vld [vmem:[%s1 + $0x2e0] sm:$0xff]
      %v516 = vld [vmem:[%s1 + $0x2e8] sm:$0xff]
      %v517 = vld [vmem:[%s1 + $0x2f0] sm:$0xff]
      %v518 = vld [vmem:[%s1 + $0x2f8] sm:$0xff]
      %v519 = vld [vmem:[%s1 + $0x300] sm:$0xff]
      %v520 = vld [vmem:[%s1 + $0x308] sm:$0xff]
      %v521 = vld [vmem:[%s1 + $0x310] sm:$0xff]
      %v522 = vld [vmem:[%s1 + $0x318] sm:$0xff]
      %vm523 = vcmask 261120
      %v525 = vsel %vm523, %v205, 0
      %v528 = vsel %vm523, %v212, 0
      %v531 = vsel %vm523, %v219, 0
      %v534 = vsel %vm523, %v226, 0
      %v537 = vsel %vm523, %v233, 0
      %v540 = vsel %vm523, %v240, 0
      %v543 = vsel %vm523, %v247, 0
      %v546 = vsel %vm523, %v254, 0
      %v549 = vsel %vm523, %v261, 0
      %v552 = vsel %vm523, %v268, 0
      %v555 = vsel %vm523, %v275, 0
      %v558 = vsel %vm523, %v282, 0
      %v561 = vsel %vm523, %v289, 0
      %v564 = vsel %vm523, %v296, 0
      %v567 = vsel %vm523, %v303, 0
      %v570 = vsel %vm523, %v310, 0
      %v573 = vsel %vm523, %v317, 0
      %v576 = vsel %vm523, %v324, 0
      %v579 = vsel %vm523, %v331, 0
      %v582 = vsel %vm523, %v338, 0
      %v585 = vsel %vm523, %v345, 0
      %v588 = vsel %vm523, %v352, 0
      %v591 = vsel %vm523, %v359, 0
      %v594 = vsel %vm523, %v366, 0
      %v597 = vsel %vm523, %v373, 0
      %v600 = vsel %vm523, %v380, 0
      %v603 = vsel %vm523, %v387, 0
      %v606 = vsel %vm523, %v394, 0
      %v609 = vsel %vm523, %v401, 0
      %v612 = vsel %vm523, %v408, 0
      %v615 = vsel %vm523, %v415, 0
      %v618 = vsel %vm523, %v422, 0
      %620 = vmatpush.msra.mxu0 %v438
      %621 = vmatpush.msra.mxu0 %v437
      %622 = vmatpush.msra.mxu0 %v436
      %623 = vmatpush.msra.mxu0 %v435
      %624 = vmatpush.msra.mxu0 %v434
      %625 = vmatpush.msra.mxu0 %v433
      %626 = vmatpush.msra.mxu0 %v432
      %627 = vmatpush.msra.mxu0 %v431
      %628 = vmatpush.msra.mxu0 %v430
      %629 = vmatpush.msra.mxu0 %v429
      %630 = vmatpush.msra.mxu0 %v428
      %631 = vmatpush.msra.mxu0 %v427
      %632 = vmatpush.msra.mxu0 %v426
      %633 = vmatpush.msra.mxu0 %v425
      %634 = vmatpush.msra.mxu0 %v424
      %635 = vmatpush.msra.mxu0 %v423
      %636 = vmatmul.f32.gmra.mxu0 %v199
      %v637 = vpop.f32.mrf.mxu0
      %v638 = vadd.f32 0.0, %v637
      %639 = vmatmul.f32.gmra.mxu0 %v206
      %v640 = vpop.f32.mrf.mxu0
      %v641 = vadd.f32 0.0, %v640
      %642 = vmatmul.f32.gmra.mxu0 %v213
      %v643 = vpop.f32.mrf.mxu0
      %v644 = vadd.f32 0.0, %v643
      %645 = vmatmul.f32.gmra.mxu0 %v220
      %v646 = vpop.f32.mrf.mxu0
      %v647 = vadd.f32 0.0, %v646
      %648 = vmatmul.f32.gmra.mxu0 %v227
      %v649 = vpop.f32.mrf.mxu0
      %v650 = vadd.f32 0.0, %v649
      %651 = vmatmul.f32.gmra.mxu0 %v234
      %v652 = vpop.f32.mrf.mxu0
      %v653 = vadd.f32 0.0, %v652
      %654 = vmatmul.f32.gmra.mxu0 %v241
      %v655 = vpop.f32.mrf.mxu0
      %v656 = vadd.f32 0.0, %v655
      %657 = vmatmul.f32.gmra.mxu0 %v248
      %v658 = vpop.f32.mrf.mxu0
      %v659 = vadd.f32 0.0, %v658
      %660 = vmatmul.f32.gmra.mxu0 %v255
      %v661 = vpop.f32.mrf.mxu0
      %v662 = vadd.f32 0.0, %v661
      %663 = vmatmul.f32.gmra.mxu0 %v262
      %v664 = vpop.f32.mrf.mxu0
      %v665 = vadd.f32 0.0, %v664
      %666 = vmatmul.f32.gmra.mxu0 %v269
      %v667 = vpop.f32.mrf.mxu0
      %v668 = vadd.f32 0.0, %v667
      %669 = vmatmul.f32.gmra.mxu0 %v276
      %v670 = vpop.f32.mrf.mxu0
      %v671 = vadd.f32 0.0, %v670
      %672 = vmatmul.f32.gmra.mxu0 %v283
      %v673 = vpop.f32.mrf.mxu0
      %v674 = vadd.f32 0.0, %v673
      %675 = vmatmul.f32.gmra.mxu0 %v290
      %v676 = vpop.f32.mrf.mxu0
      %v677 = vadd.f32 0.0, %v676
      %678 = vmatmul.f32.gmra.mxu0 %v297
      %v679 = vpop.f32.mrf.mxu0
      %v680 = vadd.f32 0.0, %v679
      %681 = vmatmul.f32.gmra.mxu0 %v304
      %v682 = vpop.f32.mrf.mxu0
      %v683 = vadd.f32 0.0, %v682
      %684 = vmatmul.f32.gmra.mxu0 %v311
      %v685 = vpop.f32.mrf.mxu0
      %v686 = vadd.f32 0.0, %v685
      %687 = vmatmul.f32.gmra.mxu0 %v318
      %v688 = vpop.f32.mrf.mxu0
      %v689 = vadd.f32 0.0, %v688
      %690 = vmatmul.f32.gmra.mxu0 %v325
      %v691 = vpop.f32.mrf.mxu0
      %v692 = vadd.f32 0.0, %v691
      %693 = vmatmul.f32.gmra.mxu0 %v332
      %v694 = vpop.f32.mrf.mxu0
      %v695 = vadd.f32 0.0, %v694
      %696 = vmatmul.f32.gmra.mxu0 %v339
      %v697 = vpop.f32.mrf.mxu0
      %v698 = vadd.f32 0.0, %v697
      %699 = vmatmul.f32.gmra.mxu0 %v346
      %v700 = vpop.f32.mrf.mxu0
      %v701 = vadd.f32 0.0, %v700
      %702 = vmatmul.f32.gmra.mxu0 %v353
      %v703 = vpop.f32.mrf.mxu0
      %v704 = vadd.f32 0.0, %v703
      %705 = vmatmul.f32.gmra.mxu0 %v360
      %v706 = vpop.f32.mrf.mxu0
      %v707 = vadd.f32 0.0, %v706
      %708 = vmatmul.f32.gmra.mxu0 %v367
      %v709 = vpop.f32.mrf.mxu0
      %v710 = vadd.f32 0.0, %v709
      %711 = vmatmul.f32.gmra.mxu0 %v374
      %v712 = vpop.f32.mrf.mxu0
      %v713 = vadd.f32 0.0, %v712
      %714 = vmatmul.f32.gmra.mxu0 %v381
      %v715 = vpop.f32.mrf.mxu0
      %v716 = vadd.f32 0.0, %v715
      %717 = vmatmul.f32.gmra.mxu0 %v388
      %v718 = vpop.f32.mrf.mxu0
      %v719 = vadd.f32 0.0, %v718
      %720 = vmatmul.f32.gmra.mxu0 %v395
      %v721 = vpop.f32.mrf.mxu0
      %v722 = vadd.f32 0.0, %v721
      %723 = vmatmul.f32.gmra.mxu0 %v402
      %v724 = vpop.f32.mrf.mxu0
      %v725 = vadd.f32 0.0, %v724
      %726 = vmatmul.f32.gmra.mxu0 %v409
      %v727 = vpop.f32.mrf.mxu0
      %v728 = vadd.f32 0.0, %v727
      %729 = vmatmul.f32.gmra.mxu0 %v416
      %v730 = vpop.f32.mrf.mxu0
      %v731 = vadd.f32 0.0, %v730
      %732 = vdwg.mxu0
      %733 = vmatpush.msra.mxu0 %v454
      %734 = vmatpush.msra.mxu0 %v453
      %735 = vmatpush.msra.mxu0 %v452
      %736 = vmatpush.msra.mxu0 %v451
      %737 = vmatpush.msra.mxu0 %v450
      %738 = vmatpush.msra.mxu0 %v449
      %739 = vmatpush.msra.mxu0 %v448
      %740 = vmatpush.msra.mxu0 %v447
      %741 = vmatpush.msra.mxu0 %v446
      %742 = vmatpush.msra.mxu0 %v445
      %743 = vmatpush.msra.mxu0 %v444
      %744 = vmatpush.msra.mxu0 %v443
      %745 = vmatpush.msra.mxu0 %v442
      %746 = vmatpush.msra.mxu0 %v441
      %747 = vmatpush.msra.mxu0 %v440
      %748 = vmatpush.msra.mxu0 %v439
      %749 = vmatmul.f32.gmra.mxu0 %v200
      %v750 = vpop.f32.mrf.mxu0
      %v751 = vadd.f32 %v638, %v750
      %752 = vmatmul.f32.gmra.mxu0 %v207
      %v753 = vpop.f32.mrf.mxu0
      %v754 = vadd.f32 %v641, %v753
      %755 = vmatmul.f32.gmra.mxu0 %v214
      %v756 = vpop.f32.mrf.mxu0
      %v757 = vadd.f32 %v644, %v756
      %758 = vmatmul.f32.gmra.mxu0 %v221
      %v759 = vpop.f32.mrf.mxu0
      %v760 = vadd.f32 %v647, %v759
      %761 = vmatmul.f32.gmra.mxu0 %v228
      %v762 = vpop.f32.mrf.mxu0
      %v763 = vadd.f32 %v650, %v762
      %764 = vmatmul.f32.gmra.mxu0 %v235
      %v765 = vpop.f32.mrf.mxu0
      %v766 = vadd.f32 %v653, %v765
      %767 = vmatmul.f32.gmra.mxu0 %v242
      %v768 = vpop.f32.mrf.mxu0
      %v769 = vadd.f32 %v656, %v768
      %770 = vmatmul.f32.gmra.mxu0 %v249
      %v771 = vpop.f32.mrf.mxu0
      %v772 = vadd.f32 %v659, %v771
      %773 = vmatmul.f32.gmra.mxu0 %v256
      %v774 = vpop.f32.mrf.mxu0
      %v775 = vadd.f32 %v662, %v774
      %776 = vmatmul.f32.gmra.mxu0 %v263
      %v777 = vpop.f32.mrf.mxu0
      %v778 = vadd.f32 %v665, %v777
      %779 = vmatmul.f32.gmra.mxu0 %v270
      %v780 = vpop.f32.mrf.mxu0
      %v781 = vadd.f32 %v668, %v780
      %782 = vmatmul.f32.gmra.mxu0 %v277
      %v783 = vpop.f32.mrf.mxu0
      %v784 = vadd.f32 %v671, %v783
      %785 = vmatmul.f32.gmra.mxu0 %v284
      %v786 = vpop.f32.mrf.mxu0
      %v787 = vadd.f32 %v674, %v786
      %788 = vmatmul.f32.gmra.mxu0 %v291
      %v789 = vpop.f32.mrf.mxu0
      %v790 = vadd.f32 %v677, %v789
      %791 = vmatmul.f32.gmra.mxu0 %v298
      %v792 = vpop.f32.mrf.mxu0
      %v793 = vadd.f32 %v680, %v792
      %794 = vmatmul.f32.gmra.mxu0 %v305
      %v795 = vpop.f32.mrf.mxu0
      %v796 = vadd.f32 %v683, %v795
      %797 = vmatmul.f32.gmra.mxu0 %v312
      %v798 = vpop.f32.mrf.mxu0
      %v799 = vadd.f32 %v686, %v798
      %800 = vmatmul.f32.gmra.mxu0 %v319
      %v801 = vpop.f32.mrf.mxu0
      %v802 = vadd.f32 %v689, %v801
      %803 = vmatmul.f32.gmra.mxu0 %v326
      %v804 = vpop.f32.mrf.mxu0
      %v805 = vadd.f32 %v692, %v804
      %806 = vmatmul.f32.gmra.mxu0 %v333
      %v807 = vpop.f32.mrf.mxu0
      %v808 = vadd.f32 %v695, %v807
      %809 = vmatmul.f32.gmra.mxu0 %v340
      %v810 = vpop.f32.mrf.mxu0
      %v811 = vadd.f32 %v698, %v810
      %812 = vmatmul.f32.gmra.mxu0 %v347
      %v813 = vpop.f32.mrf.mxu0
      %v814 = vadd.f32 %v701, %v813
      %815 = vmatmul.f32.gmra.mxu0 %v354
      %v816 = vpop.f32.mrf.mxu0
      %v817 = vadd.f32 %v704, %v816
      %818 = vmatmul.f32.gmra.mxu0 %v361
      %v819 = vpop.f32.mrf.mxu0
      %v820 = vadd.f32 %v707, %v819
      %821 = vmatmul.f32.gmra.mxu0 %v368
      %v822 = vpop.f32.mrf.mxu0
      %v823 = vadd.f32 %v710, %v822
      %824 = vmatmul.f32.gmra.mxu0 %v375
      %v825 = vpop.f32.mrf.mxu0
      %v826 = vadd.f32 %v713, %v825
      %827 = vmatmul.f32.gmra.mxu0 %v382
      %v828 = vpop.f32.mrf.mxu0
      %v829 = vadd.f32 %v716, %v828
      %830 = vmatmul.f32.gmra.mxu0 %v389
      %v831 = vpop.f32.mrf.mxu0
      %v832 = vadd.f32 %v719, %v831
      %833 = vmatmul.f32.gmra.mxu0 %v396
      %v834 = vpop.f32.mrf.mxu0
      %v835 = vadd.f32 %v722, %v834
      %836 = vmatmul.f32.gmra.mxu0 %v403
      %v837 = vpop.f32.mrf.mxu0
      %v838 = vadd.f32 %v725, %v837
      %839 = vmatmul.f32.gmra.mxu0 %v410
      %v840 = vpop.f32.mrf.mxu0
      %v841 = vadd.f32 %v728, %v840
      %842 = vmatmul.f32.gmra.mxu0 %v417
      %v843 = vpop.f32.mrf.mxu0
      %v844 = vadd.f32 %v731, %v843
      %845 = vdwg.mxu0
      %846 = vmatpush.msra.mxu0 %v470
      %847 = vmatpush.msra.mxu0 %v469
      %848 = vmatpush.msra.mxu0 %v468
      %849 = vmatpush.msra.mxu0 %v467
      %850 = vmatpush.msra.mxu0 %v466
      %851 = vmatpush.msra.mxu0 %v465
      %852 = vmatpush.msra.mxu0 %v464
      %853 = vmatpush.msra.mxu0 %v463
      %854 = vmatpush.msra.mxu0 %v462
      %855 = vmatpush.msra.mxu0 %v461
      %856 = vmatpush.msra.mxu0 %v460
      %857 = vmatpush.msra.mxu0 %v459
      %858 = vmatpush.msra.mxu0 %v458
      %859 = vmatpush.msra.mxu0 %v457
      %860 = vmatpush.msra.mxu0 %v456
      %861 = vmatpush.msra.mxu0 %v455
      %862 = vmatmul.f32.gmra.mxu0 %v201
      %v863 = vpop.f32.mrf.mxu0
      %v864 = vadd.f32 %v751, %v863
      %865 = vmatmul.f32.gmra.mxu0 %v208
      %v866 = vpop.f32.mrf.mxu0
      %v867 = vadd.f32 %v754, %v866
      %868 = vmatmul.f32.gmra.mxu0 %v215
      %v869 = vpop.f32.mrf.mxu0
      %v870 = vadd.f32 %v757, %v869
      %871 = vmatmul.f32.gmra.mxu0 %v222
      %v872 = vpop.f32.mrf.mxu0
      %v873 = vadd.f32 %v760, %v872
      %874 = vmatmul.f32.gmra.mxu0 %v229
      %v875 = vpop.f32.mrf.mxu0
      %v876 = vadd.f32 %v763, %v875
      %877 = vmatmul.f32.gmra.mxu0 %v236
      %v878 = vpop.f32.mrf.mxu0
      %v879 = vadd.f32 %v766, %v878
      %880 = vmatmul.f32.gmra.mxu0 %v243
      %v881 = vpop.f32.mrf.mxu0
      %v882 = vadd.f32 %v769, %v881
      %883 = vmatmul.f32.gmra.mxu0 %v250
      %v884 = vpop.f32.mrf.mxu0
      %v885 = vadd.f32 %v772, %v884
      %886 = vmatmul.f32.gmra.mxu0 %v257
      %v887 = vpop.f32.mrf.mxu0
      %v888 = vadd.f32 %v775, %v887
      %889 = vmatmul.f32.gmra.mxu0 %v264
      %v890 = vpop.f32.mrf.mxu0
      %v891 = vadd.f32 %v778, %v890
      %892 = vmatmul.f32.gmra.mxu0 %v271
      %v893 = vpop.f32.mrf.mxu0
      %v894 = vadd.f32 %v781, %v893
      %895 = vmatmul.f32.gmra.mxu0 %v278
      %v896 = vpop.f32.mrf.mxu0
      %v897 = vadd.f32 %v784, %v896
      %898 = vmatmul.f32.gmra.mxu0 %v285
      %v899 = vpop.f32.mrf.mxu0
      %v900 = vadd.f32 %v787, %v899
      %901 = vmatmul.f32.gmra.mxu0 %v292
      %v902 = vpop.f32.mrf.mxu0
      %v903 = vadd.f32 %v790, %v902
      %904 = vmatmul.f32.gmra.mxu0 %v299
      %v905 = vpop.f32.mrf.mxu0
      %v906 = vadd.f32 %v793, %v905
      %907 = vmatmul.f32.gmra.mxu0 %v306
      %v908 = vpop.f32.mrf.mxu0
      %v909 = vadd.f32 %v796, %v908
      %910 = vmatmul.f32.gmra.mxu0 %v313
      %v911 = vpop.f32.mrf.mxu0
      %v912 = vadd.f32 %v799, %v911
      %913 = vmatmul.f32.gmra.mxu0 %v320
      %v914 = vpop.f32.mrf.mxu0
      %v915 = vadd.f32 %v802, %v914
      %916 = vmatmul.f32.gmra.mxu0 %v327
      %v917 = vpop.f32.mrf.mxu0
      %v918 = vadd.f32 %v805, %v917
      %919 = vmatmul.f32.gmra.mxu0 %v334
      %v920 = vpop.f32.mrf.mxu0
      %v921 = vadd.f32 %v808, %v920
      %922 = vmatmul.f32.gmra.mxu0 %v341
      %v923 = vpop.f32.mrf.mxu0
      %v924 = vadd.f32 %v811, %v923
      %925 = vmatmul.f32.gmra.mxu0 %v348
      %v926 = vpop.f32.mrf.mxu0
      %v927 = vadd.f32 %v814, %v926
      %928 = vmatmul.f32.gmra.mxu0 %v355
      %v929 = vpop.f32.mrf.mxu0
      %v930 = vadd.f32 %v817, %v929
      %931 = vmatmul.f32.gmra.mxu0 %v362
      %v932 = vpop.f32.mrf.mxu0
      %v933 = vadd.f32 %v820, %v932
      %934 = vmatmul.f32.gmra.mxu0 %v369
      %v935 = vpop.f32.mrf.mxu0
      %v936 = vadd.f32 %v823, %v935
      %937 = vmatmul.f32.gmra.mxu0 %v376
      %v938 = vpop.f32.mrf.mxu0
      %v939 = vadd.f32 %v826, %v938
      %940 = vmatmul.f32.gmra.mxu0 %v383
      %v941 = vpop.f32.mrf.mxu0
      %v942 = vadd.f32 %v829, %v941
      %943 = vmatmul.f32.gmra.mxu0 %v390
      %v944 = vpop.f32.mrf.mxu0
      %v945 = vadd.f32 %v832, %v944
      %946 = vmatmul.f32.gmra.mxu0 %v397
      %v947 = vpop.f32.mrf.mxu0
      %v948 = vadd.f32 %v835, %v947
      %949 = vmatmul.f32.gmra.mxu0 %v404
      %v950 = vpop.f32.mrf.mxu0
      %v951 = vadd.f32 %v838, %v950
      %952 = vmatmul.f32.gmra.mxu0 %v411
      %v953 = vpop.f32.mrf.mxu0
      %v954 = vadd.f32 %v841, %v953
      %955 = vmatmul.f32.gmra.mxu0 %v418
      %v956 = vpop.f32.mrf.mxu0
      %v957 = vadd.f32 %v844, %v956
      %958 = vdwg.mxu0
      %959 = vmatpush.msra.mxu0 %v486
      %960 = vmatpush.msra.mxu0 %v485
      %961 = vmatpush.msra.mxu0 %v484
      %962 = vmatpush.msra.mxu0 %v483
      %963 = vmatpush.msra.mxu0 %v482
      %964 = vmatpush.msra.mxu0 %v481
      %965 = vmatpush.msra.mxu0 %v480
      %966 = vmatpush.msra.mxu0 %v479
      %967 = vmatpush.msra.mxu0 %v478
      %968 = vmatpush.msra.mxu0 %v477
      %969 = vmatpush.msra.mxu0 %v476
      %970 = vmatpush.msra.mxu0 %v475
      %971 = vmatpush.msra.mxu0 %v474
      %972 = vmatpush.msra.mxu0 %v473
      %973 = vmatpush.msra.mxu0 %v472
      %974 = vmatpush.msra.mxu0 %v471
      %975 = vmatmul.f32.gmra.mxu0 %v202
      %v976 = vpop.f32.mrf.mxu0
      %v977 = vadd.f32 %v864, %v976
      %978 = vmatmul.f32.gmra.mxu0 %v209
      %v979 = vpop.f32.mrf.mxu0
      %v980 = vadd.f32 %v867, %v979
      %981 = vmatmul.f32.gmra.mxu0 %v216
      %v982 = vpop.f32.mrf.mxu0
      %v983 = vadd.f32 %v870, %v982
      %984 = vmatmul.f32.gmra.mxu0 %v223
      %v985 = vpop.f32.mrf.mxu0
      %v986 = vadd.f32 %v873, %v985
      %987 = vmatmul.f32.gmra.mxu0 %v230
      %v988 = vpop.f32.mrf.mxu0
      %v989 = vadd.f32 %v876, %v988
      %990 = vmatmul.f32.gmra.mxu0 %v237
      %v991 = vpop.f32.mrf.mxu0
      %v992 = vadd.f32 %v879, %v991
      %993 = vmatmul.f32.gmra.mxu0 %v244
      %v994 = vpop.f32.mrf.mxu0
      %v995 = vadd.f32 %v882, %v994
      %996 = vmatmul.f32.gmra.mxu0 %v251
      %v997 = vpop.f32.mrf.mxu0
      %v998 = vadd.f32 %v885, %v997
      %999 = vmatmul.f32.gmra.mxu0 %v258
      %v1000 = vpop.f32.mrf.mxu0
      %v1001 = vadd.f32 %v888, %v1000
      %1002 = vmatmul.f32.gmra.mxu0 %v265
      %v1003 = vpop.f32.mrf.mxu0
      %v1004 = vadd.f32 %v891, %v1003
      %1005 = vmatmul.f32.gmra.mxu0 %v272
      %v1006 = vpop.f32.mrf.mxu0
      %v1007 = vadd.f32 %v894, %v1006
      %1008 = vmatmul.f32.gmra.mxu0 %v279
      %v1009 = vpop.f32.mrf.mxu0
      %v1010 = vadd.f32 %v897, %v1009
      %1011 = vmatmul.f32.gmra.mxu0 %v286
      %v1012 = vpop.f32.mrf.mxu0
      %v1013 = vadd.f32 %v900, %v1012
      %1014 = vmatmul.f32.gmra.mxu0 %v293
      %v1015 = vpop.f32.mrf.mxu0
      %v1016 = vadd.f32 %v903, %v1015
      %1017 = vmatmul.f32.gmra.mxu0 %v300
      %v1018 = vpop.f32.mrf.mxu0
      %v1019 = vadd.f32 %v906, %v1018
      %1020 = vmatmul.f32.gmra.mxu0 %v307
      %v1021 = vpop.f32.mrf.mxu0
      %v1022 = vadd.f32 %v909, %v1021
      %1023 = vmatmul.f32.gmra.mxu0 %v314
      %v1024 = vpop.f32.mrf.mxu0
      %v1025 = vadd.f32 %v912, %v1024
      %1026 = vmatmul.f32.gmra.mxu0 %v321
      %v1027 = vpop.f32.mrf.mxu0
      %v1028 = vadd.f32 %v915, %v1027
      %1029 = vmatmul.f32.gmra.mxu0 %v328
      %v1030 = vpop.f32.mrf.mxu0
      %v1031 = vadd.f32 %v918, %v1030
      %1032 = vmatmul.f32.gmra.mxu0 %v335
      %v1033 = vpop.f32.mrf.mxu0
      %v1034 = vadd.f32 %v921, %v1033
      %1035 = vmatmul.f32.gmra.mxu0 %v342
      %v1036 = vpop.f32.mrf.mxu0
      %v1037 = vadd.f32 %v924, %v1036
      %1038 = vmatmul.f32.gmra.mxu0 %v349
      %v1039 = vpop.f32.mrf.mxu0
      %v1040 = vadd.f32 %v927, %v1039
      %1041 = vmatmul.f32.gmra.mxu0 %v356
      %v1042 = vpop.f32.mrf.mxu0
      %v1043 = vadd.f32 %v930, %v1042
      %1044 = vmatmul.f32.gmra.mxu0 %v363
      %v1045 = vpop.f32.mrf.mxu0
      %v1046 = vadd.f32 %v933, %v1045
      %1047 = vmatmul.f32.gmra.mxu0 %v370
      %v1048 = vpop.f32.mrf.mxu0
      %v1049 = vadd.f32 %v936, %v1048
      %1050 = vmatmul.f32.gmra.mxu0 %v377
      %v1051 = vpop.f32.mrf.mxu0
      %v1052 = vadd.f32 %v939, %v1051
      %1053 = vmatmul.f32.gmra.mxu0 %v384
      %v1054 = vpop.f32.mrf.mxu0
      %v1055 = vadd.f32 %v942, %v1054
      %1056 = vmatmul.f32.gmra.mxu0 %v391
      %v1057 = vpop.f32.mrf.mxu0
      %v1058 = vadd.f32 %v945, %v1057
      %1059 = vmatmul.f32.gmra.mxu0 %v398
      %v1060 = vpop.f32.mrf.mxu0
      %v1061 = vadd.f32 %v948, %v1060
      %1062 = vmatmul.f32.gmra.mxu0 %v405
      %v1063 = vpop.f32.mrf.mxu0
      %v1064 = vadd.f32 %v951, %v1063
      %1065 = vmatmul.f32.gmra.mxu0 %v412
      %v1066 = vpop.f32.mrf.mxu0
      %v1067 = vadd.f32 %v954, %v1066
      %1068 = vmatmul.f32.gmra.mxu0 %v419
      %v1069 = vpop.f32.mrf.mxu0
      %v1070 = vadd.f32 %v957, %v1069
      %1071 = vdwg.mxu0
      %1072 = vmatpush.msra.mxu0 %v502
      %1073 = vmatpush.msra.mxu0 %v501
      %1074 = vmatpush.msra.mxu0 %v500
      %1075 = vmatpush.msra.mxu0 %v499
      %1076 = vmatpush.msra.mxu0 %v498
      %1077 = vmatpush.msra.mxu0 %v497
      %1078 = vmatpush.msra.mxu0 %v496
      %1079 = vmatpush.msra.mxu0 %v495
      %1080 = vmatpush.msra.mxu0 %v494
      %1081 = vmatpush.msra.mxu0 %v493
      %1082 = vmatpush.msra.mxu0 %v492
      %1083 = vmatpush.msra.mxu0 %v491
      %1084 = vmatpush.msra.mxu0 %v490
      %1085 = vmatpush.msra.mxu0 %v489
      %1086 = vmatpush.msra.mxu0 %v488
      %1087 = vmatpush.msra.mxu0 %v487
      %1088 = vmatmul.f32.gmra.mxu0 %v203
      %v1089 = vpop.f32.mrf.mxu0
      %v1090 = vadd.f32 %v977, %v1089
      %1091 = vmatmul.f32.gmra.mxu0 %v210
      %v1092 = vpop.f32.mrf.mxu0
      %v1093 = vadd.f32 %v980, %v1092
      %1094 = vmatmul.f32.gmra.mxu0 %v217
      %v1095 = vpop.f32.mrf.mxu0
      %v1096 = vadd.f32 %v983, %v1095
      %1097 = vmatmul.f32.gmra.mxu0 %v224
      %v1098 = vpop.f32.mrf.mxu0
      %v1099 = vadd.f32 %v986, %v1098
      %1100 = vmatmul.f32.gmra.mxu0 %v231
      %v1101 = vpop.f32.mrf.mxu0
      %v1102 = vadd.f32 %v989, %v1101
      %1103 = vmatmul.f32.gmra.mxu0 %v238
      %v1104 = vpop.f32.mrf.mxu0
      %v1105 = vadd.f32 %v992, %v1104
      %1106 = vmatmul.f32.gmra.mxu0 %v245
      %v1107 = vpop.f32.mrf.mxu0
      %v1108 = vadd.f32 %v995, %v1107
      %1109 = vmatmul.f32.gmra.mxu0 %v252
      %v1110 = vpop.f32.mrf.mxu0
      %v1111 = vadd.f32 %v998, %v1110
      %1112 = vmatmul.f32.gmra.mxu0 %v259
      %v1113 = vpop.f32.mrf.mxu0
      %v1114 = vadd.f32 %v1001, %v1113
      %1115 = vmatmul.f32.gmra.mxu0 %v266
      %v1116 = vpop.f32.mrf.mxu0
      %v1117 = vadd.f32 %v1004, %v1116
      %1118 = vmatmul.f32.gmra.mxu0 %v273
      %v1119 = vpop.f32.mrf.mxu0
      %v1120 = vadd.f32 %v1007, %v1119
      %1121 = vmatmul.f32.gmra.mxu0 %v280
      %v1122 = vpop.f32.mrf.mxu0
      %v1123 = vadd.f32 %v1010, %v1122
      %1124 = vmatmul.f32.gmra.mxu0 %v287
      %v1125 = vpop.f32.mrf.mxu0
      %v1126 = vadd.f32 %v1013, %v1125
      %1127 = vmatmul.f32.gmra.mxu0 %v294
      %v1128 = vpop.f32.mrf.mxu0
      %v1129 = vadd.f32 %v1016, %v1128
      %1130 = vmatmul.f32.gmra.mxu0 %v301
      %v1131 = vpop.f32.mrf.mxu0
      %v1132 = vadd.f32 %v1019, %v1131
      %1133 = vmatmul.f32.gmra.mxu0 %v308
      %v1134 = vpop.f32.mrf.mxu0
      %v1135 = vadd.f32 %v1022, %v1134
      %1136 = vmatmul.f32.gmra.mxu0 %v315
      %v1137 = vpop.f32.mrf.mxu0
      %v1138 = vadd.f32 %v1025, %v1137
      %1139 = vmatmul.f32.gmra.mxu0 %v322
      %v1140 = vpop.f32.mrf.mxu0
      %v1141 = vadd.f32 %v1028, %v1140
      %1142 = vmatmul.f32.gmra.mxu0 %v329
      %v1143 = vpop.f32.mrf.mxu0
      %v1144 = vadd.f32 %v1031, %v1143
      %1145 = vmatmul.f32.gmra.mxu0 %v336
      %v1146 = vpop.f32.mrf.mxu0
      %v1147 = vadd.f32 %v1034, %v1146
      %1148 = vmatmul.f32.gmra.mxu0 %v343
      %v1149 = vpop.f32.mrf.mxu0
      %v1150 = vadd.f32 %v1037, %v1149
      %1151 = vmatmul.f32.gmra.mxu0 %v350
      %v1152 = vpop.f32.mrf.mxu0
      %v1153 = vadd.f32 %v1040, %v1152
      %1154 = vmatmul.f32.gmra.mxu0 %v357
      %v1155 = vpop.f32.mrf.mxu0
      %v1156 = vadd.f32 %v1043, %v1155
      %1157 = vmatmul.f32.gmra.mxu0 %v364
      %v1158 = vpop.f32.mrf.mxu0
      %v1159 = vadd.f32 %v1046, %v1158
      %1160 = vmatmul.f32.gmra.mxu0 %v371
      %v1161 = vpop.f32.mrf.mxu0
      %v1162 = vadd.f32 %v1049, %v1161
      %1163 = vmatmul.f32.gmra.mxu0 %v378
      %v1164 = vpop.f32.mrf.mxu0
      %v1165 = vadd.f32 %v1052, %v1164
      %1166 = vmatmul.f32.gmra.mxu0 %v385
      %v1167 = vpop.f32.mrf.mxu0
      %v1168 = vadd.f32 %v1055, %v1167
      %1169 = vmatmul.f32.gmra.mxu0 %v392
      %v1170 = vpop.f32.mrf.mxu0
      %v1171 = vadd.f32 %v1058, %v1170
      %1172 = vmatmul.f32.gmra.mxu0 %v399
      %v1173 = vpop.f32.mrf.mxu0
      %v1174 = vadd.f32 %v1061, %v1173
      %1175 = vmatmul.f32.gmra.mxu0 %v406
      %v1176 = vpop.f32.mrf.mxu0
      %v1177 = vadd.f32 %v1064, %v1176
      %1178 = vmatmul.f32.gmra.mxu0 %v413
      %v1179 = vpop.f32.mrf.mxu0
      %v1180 = vadd.f32 %v1067, %v1179
      %1181 = vmatmul.f32.gmra.mxu0 %v420
      %v1182 = vpop.f32.mrf.mxu0
      %v1183 = vadd.f32 %v1070, %v1182
      %1184 = vdwg.mxu0
      %1185 = vmatpush.msra.mxu0 %v518
      %1186 = vmatpush.msra.mxu0 %v517
      %1187 = vmatpush.msra.mxu0 %v516
      %1188 = vmatpush.msra.mxu0 %v515
      %1189 = vmatpush.msra.mxu0 %v514
      %1190 = vmatpush.msra.mxu0 %v513
      %1191 = vmatpush.msra.mxu0 %v512
      %1192 = vmatpush.msra.mxu0 %v511
      %1193 = vmatpush.msra.mxu0 %v510
      %1194 = vmatpush.msra.mxu0 %v509
      %1195 = vmatpush.msra.mxu0 %v508
      %1196 = vmatpush.msra.mxu0 %v507
      %1197 = vmatpush.msra.mxu0 %v506
      %1198 = vmatpush.msra.mxu0 %v505
      %1199 = vmatpush.msra.mxu0 %v504
      %1200 = vmatpush.msra.mxu0 %v503
      %1201 = vmatmul.f32.gmra.mxu0 %v204
      %v1202 = vpop.f32.mrf.mxu0
      %v1203 = vadd.f32 %v1090, %v1202
      %1204 = vmatmul.f32.gmra.mxu0 %v211
      %v1205 = vpop.f32.mrf.mxu0
      %v1206 = vadd.f32 %v1093, %v1205
      %1207 = vmatmul.f32.gmra.mxu0 %v218
      %v1208 = vpop.f32.mrf.mxu0
      %v1209 = vadd.f32 %v1096, %v1208
      %1210 = vmatmul.f32.gmra.mxu0 %v225
      %v1211 = vpop.f32.mrf.mxu0
      %v1212 = vadd.f32 %v1099, %v1211
      %1213 = vmatmul.f32.gmra.mxu0 %v232
      %v1214 = vpop.f32.mrf.mxu0
      %v1215 = vadd.f32 %v1102, %v1214
      %1216 = vmatmul.f32.gmra.mxu0 %v239
      %v1217 = vpop.f32.mrf.mxu0
      %v1218 = vadd.f32 %v1105, %v1217
      %1219 = vmatmul.f32.gmra.mxu0 %v246
      %v1220 = vpop.f32.mrf.mxu0
      %v1221 = vadd.f32 %v1108, %v1220
      %1222 = vmatmul.f32.gmra.mxu0 %v253
      %v1223 = vpop.f32.mrf.mxu0
      %v1224 = vadd.f32 %v1111, %v1223
      %1225 = vmatmul.f32.gmra.mxu0 %v260
      %v1226 = vpop.f32.mrf.mxu0
      %v1227 = vadd.f32 %v1114, %v1226
      %1228 = vmatmul.f32.gmra.mxu0 %v267
      %v1229 = vpop.f32.mrf.mxu0
      %v1230 = vadd.f32 %v1117, %v1229
      %1231 = vmatmul.f32.gmra.mxu0 %v274
      %v1232 = vpop.f32.mrf.mxu0
      %v1233 = vadd.f32 %v1120, %v1232
      %1234 = vmatmul.f32.gmra.mxu0 %v281
      %v1235 = vpop.f32.mrf.mxu0
      %v1236 = vadd.f32 %v1123, %v1235
      %1237 = vmatmul.f32.gmra.mxu0 %v288
      %v1238 = vpop.f32.mrf.mxu0
      %v1239 = vadd.f32 %v1126, %v1238
      %1240 = vmatmul.f32.gmra.mxu0 %v295
      %v1241 = vpop.f32.mrf.mxu0
      %v1242 = vadd.f32 %v1129, %v1241
      %1243 = vmatmul.f32.gmra.mxu0 %v302
      %v1244 = vpop.f32.mrf.mxu0
      %v1245 = vadd.f32 %v1132, %v1244
      %1246 = vmatmul.f32.gmra.mxu0 %v309
      %v1247 = vpop.f32.mrf.mxu0
      %v1248 = vadd.f32 %v1135, %v1247
      %1249 = vmatmul.f32.gmra.mxu0 %v316
      %v1250 = vpop.f32.mrf.mxu0
      %v1251 = vadd.f32 %v1138, %v1250
      %1252 = vmatmul.f32.gmra.mxu0 %v323
      %v1253 = vpop.f32.mrf.mxu0
      %v1254 = vadd.f32 %v1141, %v1253
      %1255 = vmatmul.f32.gmra.mxu0 %v330
      %v1256 = vpop.f32.mrf.mxu0
      %v1257 = vadd.f32 %v1144, %v1256
      %1258 = vmatmul.f32.gmra.mxu0 %v337
      %v1259 = vpop.f32.mrf.mxu0
      %v1260 = vadd.f32 %v1147, %v1259
      %1261 = vmatmul.f32.gmra.mxu0 %v344
      %v1262 = vpop.f32.mrf.mxu0
      %v1263 = vadd.f32 %v1150, %v1262
      %1264 = vmatmul.f32.gmra.mxu0 %v351
      %v1265 = vpop.f32.mrf.mxu0
      %v1266 = vadd.f32 %v1153, %v1265
      %1267 = vmatmul.f32.gmra.mxu0 %v358
      %v1268 = vpop.f32.mrf.mxu0
      %v1269 = vadd.f32 %v1156, %v1268
      %1270 = vmatmul.f32.gmra.mxu0 %v365
      %v1271 = vpop.f32.mrf.mxu0
      %v1272 = vadd.f32 %v1159, %v1271
      %1273 = vmatmul.f32.gmra.mxu0 %v372
      %v1274 = vpop.f32.mrf.mxu0
      %v1275 = vadd.f32 %v1162, %v1274
      %1276 = vmatmul.f32.gmra.mxu0 %v379
      %v1277 = vpop.f32.mrf.mxu0
      %v1278 = vadd.f32 %v1165, %v1277
      %1279 = vmatmul.f32.gmra.mxu0 %v386
      %v1280 = vpop.f32.mrf.mxu0
      %v1281 = vadd.f32 %v1168, %v1280
      %1282 = vmatmul.f32.gmra.mxu0 %v393
      %v1283 = vpop.f32.mrf.mxu0
      %v1284 = vadd.f32 %v1171, %v1283
      %1285 = vmatmul.f32.gmra.mxu0 %v400
      %v1286 = vpop.f32.mrf.mxu0
      %v1287 = vadd.f32 %v1174, %v1286
      %1288 = vmatmul.f32.gmra.mxu0 %v407
      %v1289 = vpop.f32.mrf.mxu0
      %v1290 = vadd.f32 %v1177, %v1289
      %1291 = vmatmul.f32.gmra.mxu0 %v414
      %v1292 = vpop.f32.mrf.mxu0
      %v1293 = vadd.f32 %v1180, %v1292
      %1294 = vmatmul.f32.gmra.mxu0 %v421
      %v1295 = vpop.f32.mrf.mxu0
      %v1296 = vadd.f32 %v1183, %v1295
      %1297 = vdwg.mxu0
      %1298 = vmatpush.msra.mxu0 0.0
      %1299 = vmatpush.msra.mxu0 0.0
      %1300 = vmatpush.msra.mxu0 0.0
      %1301 = vmatpush.msra.mxu0 0.0
      %1302 = vmatpush.msra.mxu0 0.0
      %1303 = vmatpush.msra.mxu0 0.0
      %1304 = vmatpush.msra.mxu0 0.0
      %1305 = vmatpush.msra.mxu0 0.0
      %1306 = vmatpush.msra.mxu0 0.0
      %1307 = vmatpush.msra.mxu0 0.0
      %1308 = vmatpush.msra.mxu0 0.0
      %1309 = vmatpush.msra.mxu0 0.0
      %1310 = vmatpush.msra.mxu0 %v522
      %1311 = vmatpush.msra.mxu0 %v521
      %1312 = vmatpush.msra.mxu0 %v520
      %1313 = vmatpush.msra.mxu0 %v519
      %1314 = vmatmul.f32.gmra.mxu0 %v525
      %v1315 = vpop.f32.mrf.mxu0
      %v1316 = vadd.f32 %v1203, %v1315
      %1317 = vmatmul.f32.gmra.mxu0 %v528
      %v1318 = vpop.f32.mrf.mxu0
      %v1319 = vadd.f32 %v1206, %v1318
      %1320 = vmatmul.f32.gmra.mxu0 %v531
      %v1321 = vpop.f32.mrf.mxu0
      %v1322 = vadd.f32 %v1209, %v1321
      %1323 = vmatmul.f32.gmra.mxu0 %v534
      %v1324 = vpop.f32.mrf.mxu0
      %v1325 = vadd.f32 %v1212, %v1324
      %1326 = vmatmul.f32.gmra.mxu0 %v537
      %v1327 = vpop.f32.mrf.mxu0
      %v1328 = vadd.f32 %v1215, %v1327
      %1329 = vmatmul.f32.gmra.mxu0 %v540
      %v1330 = vpop.f32.mrf.mxu0
      %v1331 = vadd.f32 %v1218, %v1330
      %1332 = vmatmul.f32.gmra.mxu0 %v543
      %v1333 = vpop.f32.mrf.mxu0
      %v1334 = vadd.f32 %v1221, %v1333
      %1335 = vmatmul.f32.gmra.mxu0 %v546
      %v1336 = vpop.f32.mrf.mxu0
      %v1337 = vadd.f32 %v1224, %v1336
      %1338 = vmatmul.f32.gmra.mxu0 %v549
      %v1339 = vpop.f32.mrf.mxu0
      %v1340 = vadd.f32 %v1227, %v1339
      %1341 = vmatmul.f32.gmra.mxu0 %v552
      %v1342 = vpop.f32.mrf.mxu0
      %v1343 = vadd.f32 %v1230, %v1342
      %1344 = vmatmul.f32.gmra.mxu0 %v555
      %v1345 = vpop.f32.mrf.mxu0
      %v1346 = vadd.f32 %v1233, %v1345
      %1347 = vmatmul.f32.gmra.mxu0 %v558
      %v1348 = vpop.f32.mrf.mxu0
      %v1349 = vadd.f32 %v1236, %v1348
      %1350 = vmatmul.f32.gmra.mxu0 %v561
      %v1351 = vpop.f32.mrf.mxu0
      %v1352 = vadd.f32 %v1239, %v1351
      %1353 = vmatmul.f32.gmra.mxu0 %v564
      %v1354 = vpop.f32.mrf.mxu0
      %v1355 = vadd.f32 %v1242, %v1354
      %1356 = vmatmul.f32.gmra.mxu0 %v567
      %v1357 = vpop.f32.mrf.mxu0
      %v1358 = vadd.f32 %v1245, %v1357
      %1359 = vmatmul.f32.gmra.mxu0 %v570
      %v1360 = vpop.f32.mrf.mxu0
      %v1361 = vadd.f32 %v1248, %v1360
      %1362 = vmatmul.f32.gmra.mxu0 %v573
      %v1363 = vpop.f32.mrf.mxu0
      %v1364 = vadd.f32 %v1251, %v1363
      %1365 = vmatmul.f32.gmra.mxu0 %v576
      %v1366 = vpop.f32.mrf.mxu0
      %v1367 = vadd.f32 %v1254, %v1366
      %1368 = vmatmul.f32.gmra.mxu0 %v579
      %v1369 = vpop.f32.mrf.mxu0
      %v1370 = vadd.f32 %v1257, %v1369
      %1371 = vmatmul.f32.gmra.mxu0 %v582
      %v1372 = vpop.f32.mrf.mxu0
      %v1373 = vadd.f32 %v1260, %v1372
      %1374 = vmatmul.f32.gmra.mxu0 %v585
      %v1375 = vpop.f32.mrf.mxu0
      %v1376 = vadd.f32 %v1263, %v1375
      %1377 = vmatmul.f32.gmra.mxu0 %v588
      %v1378 = vpop.f32.mrf.mxu0
      %v1379 = vadd.f32 %v1266, %v1378
      %1380 = vmatmul.f32.gmra.mxu0 %v591
      %v1381 = vpop.f32.mrf.mxu0
      %v1382 = vadd.f32 %v1269, %v1381
      %1383 = vmatmul.f32.gmra.mxu0 %v594
      %v1384 = vpop.f32.mrf.mxu0
      %v1385 = vadd.f32 %v1272, %v1384
      %1386 = vmatmul.f32.gmra.mxu0 %v597
      %v1387 = vpop.f32.mrf.mxu0
      %v1388 = vadd.f32 %v1275, %v1387
      %1389 = vmatmul.f32.gmra.mxu0 %v600
      %v1390 = vpop.f32.mrf.mxu0
      %v1391 = vadd.f32 %v1278, %v1390
      %1392 = vmatmul.f32.gmra.mxu0 %v603
      %v1393 = vpop.f32.mrf.mxu0
      %v1394 = vadd.f32 %v1281, %v1393
      %1395 = vmatmul.f32.gmra.mxu0 %v606
      %v1396 = vpop.f32.mrf.mxu0
      %v1397 = vadd.f32 %v1284, %v1396
      %1398 = vmatmul.f32.gmra.mxu0 %v609
      %v1399 = vpop.f32.mrf.mxu0
      %v1400 = vadd.f32 %v1287, %v1399
      %1401 = vmatmul.f32.gmra.mxu0 %v612
      %v1402 = vpop.f32.mrf.mxu0
      %v1403 = vadd.f32 %v1290, %v1402
      %1404 = vmatmul.f32.gmra.mxu0 %v615
      %v1405 = vpop.f32.mrf.mxu0
      %v1406 = vadd.f32 %v1293, %v1405
      %1407 = vmatmul.f32.gmra.mxu0 %v618
      %v1408 = vpop.f32.mrf.mxu0
      %v1409 = vadd.f32 %v1296, %v1408
      %1410 = vdwg.mxu0
      %p1411 = scmp.eq.s32.totalorder %s16, 0
      // Predicated region
      $region29: #{resblock_forward.4} parent=27 // pred_check
        %p1412 = pneg %p1411
      $region30: #{resblock_forward.4} parent=27 // pred_check_branch
        %1414 = sbr.rel (%p1412) target = $region32
      $region31: #{resblock_forward.4} parent=27 // pred_region
        %vm1415 = vcmask 253952
        %1416 = vst.msk [vmem:[%s3] sm:$0x1] %vm1415, 0.0
        %1417 = vst.msk [vmem:[%s4] sm:$0x1] %vm1415, 0.0
      $region32: #{resblock_forward.4} parent=27 // pred_fallthru
        _
      %v1418 = vld [vmem:[%s3] sm:$0x1]
      %v1419 = vsel %vm523, %v1316, 0.0
      %v1420 = vsel %vm523, %v1319, 0.0
      %v1421 = vadd.f32 %v1419, %v1420
      %v1422 = vsel %vm523, %v1322, 0.0
      %v1423 = vadd.f32 %v1421, %v1422
      %v1424 = vsel %vm523, %v1325, 0.0
      %v1425 = vadd.f32 %v1423, %v1424
      %v1426 = vsel %vm523, %v1328, 0.0
      %v1427 = vadd.f32 %v1425, %v1426
      %v1428 = vsel %vm523, %v1331, 0.0
      %v1429 = vadd.f32 %v1427, %v1428
      %v1430 = vsel %vm523, %v1334, 0.0
      %v1431 = vadd.f32 %v1429, %v1430
      %v1432 = vsel %vm523, %v1337, 0.0
      %v1433 = vadd.f32 %v1431, %v1432
      %v1434 = vsel %vm523, %v1340, 0.0
      %v1435 = vadd.f32 %v1433, %v1434
      %v1436 = vsel %vm523, %v1343, 0.0
      %v1437 = vadd.f32 %v1435, %v1436
      %v1438 = vsel %vm523, %v1346, 0.0
      %v1439 = vadd.f32 %v1437, %v1438
      %v1440 = vsel %vm523, %v1349, 0.0
      %v1441 = vadd.f32 %v1439, %v1440
      %v1442 = vsel %vm523, %v1352, 0.0
      %v1443 = vadd.f32 %v1441, %v1442
      %v1444 = vsel %vm523, %v1355, 0.0
      %v1445 = vadd.f32 %v1443, %v1444
      %v1446 = vsel %vm523, %v1358, 0.0
      %v1447 = vadd.f32 %v1445, %v1446
      %v1448 = vsel %vm523, %v1361, 0.0
      %v1449 = vadd.f32 %v1447, %v1448
      %v1450 = vsel %vm523, %v1364, 0.0
      %v1451 = vadd.f32 %v1449, %v1450
      %v1452 = vsel %vm523, %v1367, 0.0
      %v1453 = vadd.f32 %v1451, %v1452
      %v1454 = vsel %vm523, %v1370, 0.0
      %v1455 = vadd.f32 %v1453, %v1454
      %v1456 = vsel %vm523, %v1373, 0.0
      %v1457 = vadd.f32 %v1455, %v1456
      %v1458 = vsel %vm523, %v1376, 0.0
      %v1459 = vadd.f32 %v1457, %v1458
      %v1460 = vsel %vm523, %v1379, 0.0
      %v1461 = vadd.f32 %v1459, %v1460
      %v1462 = vsel %vm523, %v1382, 0.0
      %v1463 = vadd.f32 %v1461, %v1462
      %v1464 = vsel %vm523, %v1385, 0.0
      %v1465 = vadd.f32 %v1463, %v1464
      %v1466 = vsel %vm523, %v1388, 0.0
      %v1467 = vadd.f32 %v1465, %v1466
      %v1468 = vsel %vm523, %v1391, 0.0
      %v1469 = vadd.f32 %v1467, %v1468
      %v1470 = vsel %vm523, %v1394, 0.0
      %v1471 = vadd.f32 %v1469, %v1470
      %v1472 = vsel %vm523, %v1397, 0.0
      %v1473 = vadd.f32 %v1471, %v1472
      %v1474 = vsel %vm523, %v1400, 0.0
      %v1475 = vadd.f32 %v1473, %v1474
      %v1476 = vsel %vm523, %v1403, 0.0
      %v1477 = vadd.f32 %v1475, %v1476
      %v1478 = vsel %vm523, %v1406, 0.0
      %v1479 = vadd.f32 %v1477, %v1478
      %v1480 = vsel %vm523, %v1409, 0.0
      %v1481 = vadd.f32 %v1479, %v1480
      %v1482 = vrot.slane %v1481, 4
      %v1483 = vadd.f32 %v1481, %v1482
      %v1484 = vrot.slane %v1483, 2
      %v1485 = vadd.f32 %v1483, %v1484
      %v1486 = vrot.slane %v1485, 1
      %v1487 = vadd.f32 %v1485, %v1486
      %v1488 = vadd.f32 %v1418, %v1487
      %vm1489 = vcmask 253952
      %1490 = vst.msk [vmem:[%s3] sm:$0x1] %vm1489, %v1488
      %v1491 = vld [vmem:[%s4] sm:$0x1]
      %v1492 = vmul.f32 %v1316, %v1316
      %v1493 = vmul.f32 %v1319, %v1319
      %v1494 = vmul.f32 %v1322, %v1322
      %v1495 = vmul.f32 %v1325, %v1325
      %v1496 = vmul.f32 %v1328, %v1328
      %v1497 = vmul.f32 %v1331, %v1331
      %v1498 = vmul.f32 %v1334, %v1334
      %v1499 = vmul.f32 %v1337, %v1337
      %v1500 = vmul.f32 %v1340, %v1340
      %v1501 = vmul.f32 %v1343, %v1343
      %v1502 = vmul.f32 %v1346, %v1346
      %v1503 = vmul.f32 %v1349, %v1349
      %v1504 = vmul.f32 %v1352, %v1352
      %v1505 = vmul.f32 %v1355, %v1355
      %v1506 = vmul.f32 %v1358, %v1358
      %v1507 = vmul.f32 %v1361, %v1361
      %v1508 = vmul.f32 %v1364, %v1364
      %v1509 = vmul.f32 %v1367, %v1367
      %v1510 = vmul.f32 %v1370, %v1370
      %v1511 = vmul.f32 %v1373, %v1373
      %v1512 = vmul.f32 %v1376, %v1376
      %v1513 = vmul.f32 %v1379, %v1379
      %v1514 = vmul.f32 %v1382, %v1382
      %v1515 = vmul.f32 %v1385, %v1385
      %v1516 = vmul.f32 %v1388, %v1388
      %v1517 = vmul.f32 %v1391, %v1391
      %v1518 = vmul.f32 %v1394, %v1394
      %v1519 = vmul.f32 %v1397, %v1397
      %v1520 = vmul.f32 %v1400, %v1400
      %v1521 = vmul.f32 %v1403, %v1403
      %v1522 = vmul.f32 %v1406, %v1406
      %v1523 = vmul.f32 %v1409, %v1409
      %v1524 = vsel %vm523, %v1492, 0.0
      %v1525 = vsel %vm523, %v1493, 0.0
      %v1526 = vadd.f32 %v1524, %v1525
      %v1527 = vsel %vm523, %v1494, 0.0
      %v1528 = vadd.f32 %v1526, %v1527
      %v1529 = vsel %vm523, %v1495, 0.0
      %v1530 = vadd.f32 %v1528, %v1529
      %v1531 = vsel %vm523, %v1496, 0.0
      %v1532 = vadd.f32 %v1530, %v1531
      %v1533 = vsel %vm523, %v1497, 0.0
      %v1534 = vadd.f32 %v1532, %v1533
      %v1535 = vsel %vm523, %v1498, 0.0
      %v1536 = vadd.f32 %v1534, %v1535
      %v1537 = vsel %vm523, %v1499, 0.0
      %v1538 = vadd.f32 %v1536, %v1537
      %v1539 = vsel %vm523, %v1500, 0.0
      %v1540 = vadd.f32 %v1538, %v1539
      %v1541 = vsel %vm523, %v1501, 0.0
      %v1542 = vadd.f32 %v1540, %v1541
      %v1543 = vsel %vm523, %v1502, 0.0
      %v1544 = vadd.f32 %v1542, %v1543
      %v1545 = vsel %vm523, %v1503, 0.0
      %v1546 = vadd.f32 %v1544, %v1545
      %v1547 = vsel %vm523, %v1504, 0.0
      %v1548 = vadd.f32 %v1546, %v1547
      %v1549 = vsel %vm523, %v1505, 0.0
      %v1550 = vadd.f32 %v1548, %v1549
      %v1551 = vsel %vm523, %v1506, 0.0
      %v1552 = vadd.f32 %v1550, %v1551
      %v1553 = vsel %vm523, %v1507, 0.0
      %v1554 = vadd.f32 %v1552, %v1553
      %v1555 = vsel %vm523, %v1508, 0.0
      %v1556 = vadd.f32 %v1554, %v1555
      %v1557 = vsel %vm523, %v1509, 0.0
      %v1558 = vadd.f32 %v1556, %v1557
      %v1559 = vsel %vm523, %v1510, 0.0
      %v1560 = vadd.f32 %v1558, %v1559
      %v1561 = vsel %vm523, %v1511, 0.0
      %v1562 = vadd.f32 %v1560, %v1561
      %v1563 = vsel %vm523, %v1512, 0.0
      %v1564 = vadd.f32 %v1562, %v1563
      %v1565 = vsel %vm523, %v1513, 0.0
      %v1566 = vadd.f32 %v1564, %v1565
      %v1567 = vsel %vm523, %v1514, 0.0
      %v1568 = vadd.f32 %v1566, %v1567
      %v1569 = vsel %vm523, %v1515, 0.0
      %v1570 = vadd.f32 %v1568, %v1569
      %v1571 = vsel %vm523, %v1516, 0.0
      %v1572 = vadd.f32 %v1570, %v1571
      %v1573 = vsel %vm523, %v1517, 0.0
      %v1574 = vadd.f32 %v1572, %v1573
      %v1575 = vsel %vm523, %v1518, 0.0
      %v1576 = vadd.f32 %v1574, %v1575
      %v1577 = vsel %vm523, %v1519, 0.0
      %v1578 = vadd.f32 %v1576, %v1577
      %v1579 = vsel %vm523, %v1520, 0.0
      %v1580 = vadd.f32 %v1578, %v1579
      %v1581 = vsel %vm523, %v1521, 0.0
      %v1582 = vadd.f32 %v1580, %v1581
      %v1583 = vsel %vm523, %v1522, 0.0
      %v1584 = vadd.f32 %v1582, %v1583
      %v1585 = vsel %vm523, %v1523, 0.0
      %v1586 = vadd.f32 %v1584, %v1585
      %v1587 = vrot.slane %v1586, 4
      %v1588 = vadd.f32 %v1586, %v1587
      %v1589 = vrot.slane %v1588, 2
      %v1590 = vadd.f32 %v1588, %v1589
      %v1591 = vrot.slane %v1590, 1
      %v1592 = vadd.f32 %v1590, %v1591
      %v1593 = vadd.f32 %v1491, %v1592
      %1594 = vst.msk [vmem:[%s4] sm:$0x1] %vm1489, %v1593
      %1595 = vst.msk [vmem:[%s197] sm:$0xff] %vm523, %v1316
      %1596 = vst.msk [vmem:[%s197 + $0x8] sm:$0xff] %vm523, %v1319
      %1597 = vst.msk [vmem:[%s197 + $0x10] sm:$0xff] %vm523, %v1322
      %1598 = vst.msk [vmem:[%s197 + $0x18] sm:$0xff] %vm523, %v1325
      %1599 = vst.msk [vmem:[%s197 + $0x20] sm:$0xff] %vm523, %v1328
      %1600 = vst.msk [vmem:[%s197 + $0x28] sm:$0xff] %vm523, %v1331
      %1601 = vst.msk [vmem:[%s197 + $0x30] sm:$0xff] %vm523, %v1334
      %1602 = vst.msk [vmem:[%s197 + $0x38] sm:$0xff] %vm523, %v1337
      %1603 = vst.msk [vmem:[%s197 + $0x40] sm:$0xff] %vm523, %v1340
      %1604 = vst.msk [vmem:[%s197 + $0x48] sm:$0xff] %vm523, %v1343
      %1605 = vst.msk [vmem:[%s197 + $0x50] sm:$0xff] %vm523, %v1346
      %1606 = vst.msk [vmem:[%s197 + $0x58] sm:$0xff] %vm523, %v1349
      %1607 = vst.msk [vmem:[%s197 + $0x60] sm:$0xff] %vm523, %v1352
      %1608 = vst.msk [vmem:[%s197 + $0x68] sm:$0xff] %vm523, %v1355
      %1609 = vst.msk [vmem:[%s197 + $0x70] sm:$0xff] %vm523, %v1358
      %1610 = vst.msk [vmem:[%s197 + $0x78] sm:$0xff] %vm523, %v1361
      %1611 = vst.msk [vmem:[%s197 + $0x80] sm:$0xff] %vm523, %v1364
      %1612 = vst.msk [vmem:[%s197 + $0x88] sm:$0xff] %vm523, %v1367
      %1613 = vst.msk [vmem:[%s197 + $0x90] sm:$0xff] %vm523, %v1370
      %1614 = vst.msk [vmem:[%s197 + $0x98] sm:$0xff] %vm523, %v1373
      %1615 = vst.msk [vmem:[%s197 + $0xa0] sm:$0xff] %vm523, %v1376
      %1616 = vst.msk [vmem:[%s197 + $0xa8] sm:$0xff] %vm523, %v1379
      %1617 = vst.msk [vmem:[%s197 + $0xb0] sm:$0xff] %vm523, %v1382
      %1618 = vst.msk [vmem:[%s197 + $0xb8] sm:$0xff] %vm523, %v1385
      %1619 = vst.msk [vmem:[%s197 + $0xc0] sm:$0xff] %vm523, %v1388
      %1620 = vst.msk [vmem:[%s197 + $0xc8] sm:$0xff] %vm523, %v1391
      %1621 = vst.msk [vmem:[%s197 + $0xd0] sm:$0xff] %vm523, %v1394
      %1622 = vst.msk [vmem:[%s197 + $0xd8] sm:$0xff] %vm523, %v1397
      %1623 = vst.msk [vmem:[%s197 + $0xe0] sm:$0xff] %vm523, %v1400
      %1624 = vst.msk [vmem:[%s197 + $0xe8] sm:$0xff] %vm523, %v1403
      %1625 = vst.msk [vmem:[%s197 + $0xf0] sm:$0xff] %vm523, %v1406
      %1626 = vst.msk [vmem:[%s197 + $0xf8] sm:$0xff] %vm523, %v1409
      %s1627 = smul.u32 32, %s16
      %p1628 = scmp.lt.s32.totalorder %s1627, 63
      %s1629 = scalar_select %p1628, %s1627, 63
      %s1630 = smul.addr %s1629, 8
      %s1631 = scalar_lea.vmem %s2, %s1630
      // Predicated region
      $region33: #{resblock_forward.4} parent=27 // pred_check
        %p1632 = pneg %p81
      $region34: #{resblock_forward.4} parent=27 // pred_check_branch
        %1634 = sbr.rel (%p1632) target = $region36
      $region35: #{resblock_forward.4} parent=27 // pred_region
        %s1635 = smul.u32 32, %s16
      $region36: #{resblock_forward.4} parent=27 // pred_fallthru
        _
      // Predicated region
      $region37: #{resblock_forward.4} parent=27 // pred_check
        %p1636 = pneg %p102
      $region38: #{resblock_forward.4} parent=27 // pred_check_branch
        %1638 = sbr.rel (%p1636) target = $region40
      $region39: #{resblock_forward.4} parent=27 // pred_region
        _
      $region40: #{resblock_forward.4} parent=27 // pred_fallthru
        _
      // Predicated region
      $region41: #{resblock_forward.4} parent=27 // pred_check
        %p1639 = pneg %p123
      $region42: #{resblock_forward.4} parent=27 // pred_check_branch
        %1641 = sbr.rel (%p1639) target = $region44
      $region43: #{resblock_forward.4} parent=27 // pred_region
        _
      $region44: #{resblock_forward.4} parent=27 // pred_fallthru
        _
      // Predicated region
      $region45: #{resblock_forward.4} parent=27 // pred_check
        %p1642 = pneg %p102
      $region46: #{resblock_forward.4} parent=27 // pred_check_branch
        %1644 = sbr.rel (%p1642) target = $region48
      $region47: #{resblock_forward.4} parent=27 // pred_region
        _
      $region48: #{resblock_forward.4} parent=27 // pred_fallthru
        _
      // Predicated region
      $region49: #{resblock_forward.4} parent=27 // pred_check
        %p1645 = pneg %p123
      $region50: #{resblock_forward.4} parent=27 // pred_check_branch
        %1647 = sbr.rel (%p1645) target = $region52
      $region51: #{resblock_forward.4} parent=27 // pred_region
        _
      $region52: #{resblock_forward.4} parent=27 // pred_fallthru
        _
    $region28: #{resblock_forward.4} parent=5 // pred_fallthru
      _
    %p1648 = scmp.le.s32.totalorder 2, %s11
    // Predicated region
    $region53: #{resblock_forward.4} parent=5 // pred_check
      %p1649 = pneg %p1648
    $region54: #{resblock_forward.4} parent=5 // pred_check_branch
      %1651 = sbr.rel (%p1649) target = $region56
    $region55: #{resblock_forward.4} parent=5 // pred_region
      %s1652 = ssub.s32 %s11, 2
      // Predicated region
      $region57: #{resblock_forward.4} parent=55 // pred_check
        %p1653 = pneg %p87
      $region58: #{resblock_forward.4} parent=55 // pred_check_branch
        %1655 = sbr.rel (%p1653) target = $region60
      $region59: #{resblock_forward.4} parent=55 // pred_region
        %s1656 = smul.u32 32, %s17
        %p1657 = scmp.lt.s32.totalorder %s1656, 63
        %s1658 = scalar_select %p1657, %s1656, 63
        %s1659 = smul.addr %s1658, 8
        %s1660 = scalar_lea.vmem %s2, %s1659
      $region60: #{resblock_forward.4} parent=55 // pred_fallthru
        _
    $region56: #{resblock_forward.4} parent=5 // pred_fallthru
      _
  $region6: #{resblock_forward.4} parent=0 // loop_footer
    %s15 = sadd.s32 1, %s11
  $region7: #{resblock_forward.4} parent=0 // loop_footer_branch
    %10 = sbr.rel target = $region3
  $region8: #{resblock_forward.4} parent=0 // loop_exit
    _

// kernel: resblock_forward.5
$region0: #{resblock_forward.5}
  #allocation0 [shape = 'u32[]', space=smem, size = 0x4, offset = 0x4, fixed_abs, tag = 'smem constant byte address 0x4 - core index']
  #allocation1 [shape = 'u32[72,128]{1,0:T(1,128)}', space=vmem, size = 0x9000, scoped, tag = 'internal scratch']
  %s0 = inlined_call_operand.vmem [shape: f32[32,512], index: 0, kind: input, shape index: {}]
  %s1 = inlined_call_operand.vmem [shape: f32[1,512], index: 1, kind: input, shape index: {}]
  %s2 = inlined_call_operand.vmem [shape: f32[1,512], index: 2, kind: input, shape index: {}]
  %s3 = inlined_call_operand.vmem [shape: f32[32,512], index: 3, kind: output, shape index: {}]
  %s4 = sld [smem:[#allocation0]]
  $region45: #{resblock_forward.5} parent=0
    _
  %s6 = ssub.s32 1, %s4
  %s7 = scalar_select 0, %s6, %s4
  loop: start=0, step=1, limit=4
  $region2: #{resblock_forward.5} parent=0 // loop_pre_header
    _
  $region3: #{resblock_forward.5} parent=0 // loop_header
    %s9 = sphi 0, %s13
    %p10 = scmp.ge.s32.totalorder %s9, 4
    %s19 = sphi 0, %s21
    %s22 = sphi 0, %s19
    %s23 = sphi 0, %s22
    %s39 = sphi 0, %s23
    %s43 = sphi 0, %s43
    %s45 = sphi 0, %s43
    %s46 = sphi 0, %s45
    %s60 = sphi 0, %s46
    %s64 = sphi 0, %s64
    %s66 = sphi 0, %s64
    %s67 = sphi 0, %s66
    %s81 = sphi 0, %s67
    %s87 = sphi 0, %s89
    %s90 = sphi 0, %s87
    %s91 = sphi 0, %s90
    %s107 = sphi 0, %s91
  $region4: #{resblock_forward.5} parent=0 // loop_header_branch
    %12 = sbr.rel (%p10) target = $region8
  $region5: #{resblock_forward.5} parent=0 // loop_body
    %s14 = ssub.s32 %s9, 1
    %s15 = ssub.s32 %s9, 2
    %s16 = sadd.s32 %s9, 1
    %s17 = ssub.s32 %s9, %s16
    %p18 = scmp.eq.s32.totalorder %s17, 0
    %s20 = sadd.s32 %s19, 1
    %s21 = scalar_select %p18, %s19, %s20
    %p24 = pneg %p18
    %p25 = scmp.eq.s32.totalorder %s9, 1
    %p26 = por %p24, %p25
    %p27 = scmp.ne.s32.totalorder %s19, %s22
    %p28 = scmp.eq.s32.totalorder %s9, 0
    %p29 = por %p27, %p28
    %p30 = scmp.ne.s32.totalorder %s19, %s22
    %p31 = scmp.eq.s32.totalorder %s14, 1
    %p32 = por %p30, %p31
    %p33 = scmp.ne.s32.totalorder %s22, %s23
    %p34 = scmp.eq.s32.totalorder %s14, 0
    %p35 = por %p33, %p34
    %p36 = scmp.ne.s32.totalorder %s22, %s23
    %p37 = scmp.eq.s32.totalorder %s15, 1
    %p38 = por %p36, %p37
    %p40 = scmp.ne.s32.totalorder %s23, %s39
    %p41 = scmp.eq.s32.totalorder %s15, 0
    %p42 = por %p40, %p41
    %s44 = sadd.s32 %s43, 1
    %p47 = scmp.eq.s32.totalorder %s9, 1
    %p48 = scmp.ne.s32.totalorder %s43, %s45
    %p49 = scmp.eq.s32.totalorder %s9, 0
    %p50 = por %p48, %p49
    %p51 = scmp.ne.s32.totalorder %s43, %s45
    %p52 = scmp.eq.s32.totalorder %s14, 1
    %p53 = por %p51, %p52
    %p54 = scmp.ne.s32.totalorder %s45, %s46
    %p55 = scmp.eq.s32.totalorder %s14, 0
    %p56 = por %p54, %p55
    %p57 = scmp.ne.s32.totalorder %s45, %s46
    %p58 = scmp.eq.s32.totalorder %s15, 1
    %p59 = por %p57, %p58
    %p61 = scmp.ne.s32.totalorder %s46, %s60
    %p62 = scmp.eq.s32.totalorder %s15, 0
    %p63 = por %p61, %p62
    %s65 = sadd.s32 %s64, 1
    %p68 = scmp.eq.s32.totalorder %s9, 1
    %p69 = scmp.ne.s32.totalorder %s64, %s66
    %p70 = scmp.eq.s32.totalorder %s9, 0
    %p71 = por %p69, %p70
    %p72 = scmp.ne.s32.totalorder %s64, %s66
    %p73 = scmp.eq.s32.totalorder %s14, 1
    %p74 = por %p72, %p73
    %p75 = scmp.ne.s32.totalorder %s66, %s67
    %p76 = scmp.eq.s32.totalorder %s14, 0
    %p77 = por %p75, %p76
    %p78 = scmp.ne.s32.totalorder %s66, %s67
    %p79 = scmp.eq.s32.totalorder %s15, 1
    %p80 = por %p78, %p79
    %p82 = scmp.ne.s32.totalorder %s67, %s81
    %p83 = scmp.eq.s32.totalorder %s15, 0
    %p84 = por %p82, %p83
    %s85 = ssub.s32 %s9, %s16
    %p86 = scmp.eq.s32.totalorder %s85, 0
    %s88 = sadd.s32 %s87, 1
    %s89 = scalar_select %p86, %s87, %s88
    %p92 = pneg %p86
    %p93 = scmp.eq.s32.totalorder %s9, 1
    %p94 = por %p92, %p93
    %p95 = scmp.ne.s32.totalorder %s87, %s90
    %p96 = scmp.eq.s32.totalorder %s9, 0
    %p97 = por %p95, %p96
    %p98 = scmp.ne.s32.totalorder %s87, %s90
    %p99 = scmp.eq.s32.totalorder %s14, 1
    %p100 = por %p98, %p99
    %p101 = scmp.ne.s32.totalorder %s90, %s91
    %p102 = scmp.eq.s32.totalorder %s14, 0
    %p103 = por %p101, %p102
    %p104 = scmp.ne.s32.totalorder %s90, %s91
    %p105 = scmp.eq.s32.totalorder %s15, 1
    %p106 = por %p104, %p105
    %p108 = scmp.ne.s32.totalorder %s91, %s107
    %p109 = scmp.eq.s32.totalorder %s15, 0
    %p110 = por %p108, %p109
    %p111 = scmp.le.s32.totalorder 1, %s9
    %p112 = scmp.lt.s32.totalorder %s9, 3
    %p113 = pnand %p111, %p112
    %p114 = pneg %p113
    // Predicated region
    $region9: #{resblock_forward.5} parent=5 // pred_check
      _
    $region10: #{resblock_forward.5} parent=5 // pred_check_branch
      %116 = sbr.rel (%p113) target = $region12
    $region11: #{resblock_forward.5} parent=5 // pred_region
      %s117 = ssub.s32 %s9, 1
      // Predicated region
      $region13: #{resblock_forward.5} parent=11 // pred_check
        %p118 = pneg %p56
      $region14: #{resblock_forward.5} parent=11 // pred_check_branch
        %120 = sbr.rel (%p118) target = $region16
      $region15: #{resblock_forward.5} parent=11 // pred_region
        _
      $region16: #{resblock_forward.5} parent=11 // pred_fallthru
        _
      // Predicated region
      $region17: #{resblock_forward.5} parent=11 // pred_check
        %p121 = pneg %p77
      $region18: #{resblock_forward.5} parent=11 // pred_check_branch
        %123 = sbr.rel (%p121) target = $region20
      $region19: #{resblock_forward.5} parent=11 // pred_region
        _
      $region20: #{resblock_forward.5} parent=11 // pred_fallthru
        _
    $region12: #{resblock_forward.5} parent=5 // pred_fallthru
      _
    %p124 = scmp.lt.s32.totalorder %s9, 2
    // Predicated region
    $region21: #{resblock_forward.5} parent=5 // pred_check
      %p125 = pneg %p124
    $region22: #{resblock_forward.5} parent=5 // pred_check_branch
      %127 = sbr.rel (%p125) target = $region24
    $region23: #{resblock_forward.5} parent=5 // pred_region
      // Predicated region
      $region25: #{resblock_forward.5} parent=23 // pred_check
        %p128 = pneg %p29
      $region26: #{resblock_forward.5} parent=23 // pred_check_branch
        %130 = sbr.rel (%p128) target = $region28
      $region27: #{resblock_forward.5} parent=23 // pred_region
        %s131 = smul.u32 2, %s9
        %p132 = scmp.lt.s32.totalorder %s131, 3
        %s133 = scalar_select %p132, %s131, 3
        %s134 = smul.addr %s133, 4
        %s135 = smul.addr %s134, 8
        %s136 = scalar_lea.vmem %s0, %s135
        %s137 = smul.u32 2, %s9
      $region28: #{resblock_forward.5} parent=23 // pred_fallthru
        _
    $region24: #{resblock_forward.5} parent=5 // pred_fallthru
      _
    %p138 = scmp.le.s32.totalorder 1, %s9
    %p139 = scmp.lt.s32.totalorder %s9, 3
    %p140 = pnand %p138, %p139
    %p141 = pneg %p140
    // Predicated region
    $region29: #{resblock_forward.5} parent=5 // pred_check
      _
    $region30: #{resblock_forward.5} parent=5 // pred_check_branch
      %143 = sbr.rel (%p140) target = $region32
    $region31: #{resblock_forward.5} parent=5 // pred_region
      %s144 = ssub.s32 %s9, 1
      %s145 = smul.u32 2, %s14
      %p146 = scmp.lt.s32.totalorder %s145, 3
      %s147 = scalar_select %p146, %s145, 3
      %s148 = smul.addr %s147, 4
      %s149 = smul.addr %s148, 8
      %s150 = scalar_lea.vmem %s0, %s149
      %p151 = pneg %p35
      %p152 = pneg %p32
      %p153 = pneg %p56
      %p154 = pneg %p53
      %p155 = pneg %p77
      %p156 = pneg %p74
      %p157 = pneg %p103
      %p158 = pneg %p100
      %s159 = smul.u32 2, %s14
      %p160 = scmp.lt.s32.totalorder %s159, 3
      %s161 = scalar_select %p160, %s159, 3
      %s162 = smul.addr %s161, 4
      %s163 = smul.addr %s162, 8
      %s164 = scalar_lea.vmem %s3, %s163
      %s165 = smul.u32 2, %s14
      %p166 = scmp.lt.s32.totalorder %s165, 3
      %s167 = scalar_select %p166, %s165, 3
      %s168 = smul.addr %s167, 4
      %s169 = smul.addr %s168, 8
      %s170 = scalar_lea.vmem %s0, %s169
      %s171 = smul.u32 2, %s14
      %s172 = smul.u32 2, %s14
      %p173 = scmp.lt.s32.totalorder %s172, 3
      %s174 = scalar_select %p173, %s172, 3
      %s175 = smul.addr %s174, 4
      %s176 = smul.addr %s175, 8
      %s177 = scalar_lea.vmem %s3, %s176
      %s178 = smul.u32 2, %s14
      %v179 = vld [vmem:[%s170] sm:$0xff]
      %v180 = vld [vmem:[%s170 + $0x8] sm:$0xff]
      %v181 = vld [vmem:[%s170 + $0x10] sm:$0xff]
      %v182 = vld [vmem:[%s170 + $0x18] sm:$0xff]
      %v183 = vld [vmem:[%s170 + $0x20] sm:$0xff]
      %v184 = vld [vmem:[%s170 + $0x28] sm:$0xff]
      %v185 = vld [vmem:[%s170 + $0x30] sm:$0xff]
      %v186 = vld [vmem:[%s170 + $0x38] sm:$0xff]
      %v187 = vld [vmem:[%s1] sm:$0xf]
      %v189 = vperm.slane %v187, 0
      %v190 = vperm.slane %v187, 1
      %v191 = vperm.slane %v187, 2
      %v192 = vperm.slane %v187, 3
      %v197 = vmul.f32 %v179, %v189
      %v198 = vmul.f32 %v180, %v190
      %v199 = vmul.f32 %v181, %v191
      %v200 = vmul.f32 %v182, %v192
      %v201 = vmul.f32 %v183, %v189
      %v202 = vmul.f32 %v184, %v190
      %v203 = vmul.f32 %v185, %v191
      %v204 = vmul.f32 %v186, %v192
      %v205 = vld [vmem:[%s2] sm:$0xf]
      %v207 = vperm.slane %v205, 0
      %v208 = vperm.slane %v205, 1
      %v209 = vperm.slane %v205, 2
      %v210 = vperm.slane %v205, 3
      %v215 = vadd.f32 %v197, %v207
      %v216 = vadd.f32 %v198, %v208
      %v217 = vadd.f32 %v199, %v209
      %v218 = vadd.f32 %v200, %v210
      %v219 = vadd.f32 %v201, %v207
      %v220 = vadd.f32 %v202, %v208
      %v221 = vadd.f32 %v203, %v209
      %v222 = vadd.f32 %v204, %v210
      %v223 = vmax.f32 %v215, 0.0
      %v224 = vmax.f32 %v216, 0.0
      %v225 = vmax.f32 %v217, 0.0
      %v226 = vmax.f32 %v218, 0.0
      %v227 = vmax.f32 %v219, 0.0
      %v228 = vmax.f32 %v220, 0.0
      %v229 = vmax.f32 %v221, 0.0
      %v230 = vmax.f32 %v222, 0.0
      %231 = vst [vmem:[%s177] sm:$0xff] %v223
      %232 = vst [vmem:[%s177 + $0x8] sm:$0xff] %v224
      %233 = vst [vmem:[%s177 + $0x10] sm:$0xff] %v225
      %234 = vst [vmem:[%s177 + $0x18] sm:$0xff] %v226
      %235 = vst [vmem:[%s177 + $0x20] sm:$0xff] %v227
      %236 = vst [vmem:[%s177 + $0x28] sm:$0xff] %v228
      %237 = vst [vmem:[%s177 + $0x30] sm:$0xff] %v229
      %238 = vst [vmem:[%s177 + $0x38] sm:$0xff] %v230
      %s239 = smul.u32 2, %s14
      %p240 = scmp.lt.s32.totalorder %s239, 3
      %s241 = scalar_select %p240, %s239, 3
      %s242 = smul.addr %s241, 4
      %s243 = smul.addr %s242, 8
      %s244 = scalar_lea.vmem %s3, %s243
      // Predicated region
      $region33: #{resblock_forward.5} parent=31 // pred_check
        %p245 = pneg %p100
      $region34: #{resblock_forward.5} parent=31 // pred_check_branch
        %247 = sbr.rel (%p245) target = $region36
      $region35: #{resblock_forward.5} parent=31 // pred_region
        %s248 = smul.u32 2, %s14
      $region36: #{resblock_forward.5} parent=31 // pred_fallthru
        _
    $region32: #{resblock_forward.5} parent=5 // pred_fallthru
      _
    %p249 = scmp.le.s32.totalorder 2, %s9
    // Predicated region
    $region37: #{resblock_forward.5} parent=5 // pred_check
      %p250 = pneg %p249
    $region38: #{resblock_forward.5} parent=5 // pred_check_branch
      %252 = sbr.rel (%p250) target = $region40
    $region39: #{resblock_forward.5} parent=5 // pred_region
      %s253 = ssub.s32 %s9, 2
      // Predicated region
      $region41: #{resblock_forward.5} parent=39 // pred_check
        %p254 = pneg %p106
      $region42: #{resblock_forward.5} parent=39 // pred_check_branch
        %256 = sbr.rel (%p254) target = $region44
      $region43: #{resblock_forward.5} parent=39 // pred_region
        %s257 = smul.u32 2, %s15
        %p258 = scmp.lt.s32.totalorder %s257, 3
        %s259 = scalar_select %p258, %s257, 3
        %s260 = smul.addr %s259, 4
        %s261 = smul.addr %s260, 8
        %s262 = scalar_lea.vmem %s3, %s261
      $region44: #{resblock_forward.5} parent=39 // pred_fallthru
        _
    $region40: #{resblock_forward.5} parent=5 // pred_fallthru
      _
  $region6: #{resblock_forward.5} parent=0 // loop_footer
    %s13 = sadd.s32 1, %s9
  $region7: #{resblock_forward.5} parent=0 // loop_footer_branch
    %8 = sbr.rel target = $region3
  $region8: #{resblock_forward.5} parent=0 // loop_exit
    _

// kernel: resblock_forward.7
$region0: #{resblock_forward.7}
  #allocation0 [shape = 'u32[]', space=smem, size = 0x4, offset = 0x4, fixed_abs, tag = 'smem constant byte address 0x4 - core index']
  #allocation1 [shape = 'u32[72,128]{1,0:T(1,128)}', space=vmem, size = 0x9000, scoped, tag = 'internal scratch']
  %s0 = inlined_call_operand.vmem [shape: f32[32,512], index: 0, kind: input, shape index: {}]
  %s1 = inlined_call_operand.vmem [shape: f32[1,512], index: 1, kind: input, shape index: {}]
  %s2 = inlined_call_operand.vmem [shape: f32[1,512], index: 2, kind: input, shape index: {}]
  %s3 = inlined_call_operand.vmem [shape: f32[32,512], index: 3, kind: input, shape index: {}]
  %s4 = inlined_call_operand.vmem [shape: f32[32,512], index: 4, kind: output, shape index: {}]
  %s5 = sld [smem:[#allocation0]]
  $region49: #{resblock_forward.7} parent=0
    _
  %s7 = ssub.s32 1, %s5
  %s8 = scalar_select 0, %s7, %s5
  loop: start=0, step=1, limit=4
  $region2: #{resblock_forward.7} parent=0 // loop_pre_header
    _
  $region3: #{resblock_forward.7} parent=0 // loop_header
    %s10 = sphi 0, %s14
    %p11 = scmp.ge.s32.totalorder %s10, 4
    %s20 = sphi 0, %s22
    %s23 = sphi 0, %s20
    %s24 = sphi 0, %s23
    %s40 = sphi 0, %s24
    %s44 = sphi 0, %s44
    %s46 = sphi 0, %s44
    %s47 = sphi 0, %s46
    %s61 = sphi 0, %s47
    %s65 = sphi 0, %s65
    %s67 = sphi 0, %s65
    %s68 = sphi 0, %s67
    %s82 = sphi 0, %s68
    %s88 = sphi 0, %s90
    %s91 = sphi 0, %s88
    %s92 = sphi 0, %s91
    %s108 = sphi 0, %s92
    %s114 = sphi 0, %s116
    %s117 = sphi 0, %s114
    %s118 = sphi 0, %s117
    %s134 = sphi 0, %s118
  $region4: #{resblock_forward.7} parent=0 // loop_header_branch
    %13 = sbr.rel (%p11) target = $region8
  $region5: #{resblock_forward.7} parent=0 // loop_body
    %s15 = ssub.s32 %s10, 1
    %s16 = ssub.s32 %s10, 2
    %s17 = sadd.s32 %s10, 1
    %s18 = ssub.s32 %s10, %s17
    %p19 = scmp.eq.s32.totalorder %s18, 0
    %s21 = sadd.s32 %s20, 1
    %s22 = scalar_select %p19, %s20, %s21
    %p25 = pneg %p19
    %p26 = scmp.eq.s32.totalorder %s10, 1
    %p27 = por %p25, %p26
    %p28 = scmp.ne.s32.totalorder %s20, %s23
    %p29 = scmp.eq.s32.totalorder %s10, 0
    %p30 = por %p28, %p29
    %p31 = scmp.ne.s32.totalorder %s20, %s23
    %p32 = scmp.eq.s32.totalorder %s15, 1
    %p33 = por %p31, %p32
    %p34 = scmp.ne.s32.totalorder %s23, %s24
    %p35 = scmp.eq.s32.totalorder %s15, 0
    %p36 = por %p34, %p35
    %p37 = scmp.ne.s32.totalorder %s23, %s24
    %p38 = scmp.eq.s32.totalorder %s16, 1
    %p39 = por %p37, %p38
    %p41 = scmp.ne.s32.totalorder %s24, %s40
    %p42 = scmp.eq.s32.totalorder %s16, 0
    %p43 = por %p41, %p42
    %s45 = sadd.s32 %s44, 1
    %p48 = scmp.eq.s32.totalorder %s10, 1
    %p49 = scmp.ne.s32.totalorder %s44, %s46
    %p50 = scmp.eq.s32.totalorder %s10, 0
    %p51 = por %p49, %p50
    %p52 = scmp.ne.s32.totalorder %s44, %s46
    %p53 = scmp.eq.s32.totalorder %s15, 1
    %p54 = por %p52, %p53
    %p55 = scmp.ne.s32.totalorder %s46, %s47
    %p56 = scmp.eq.s32.totalorder %s15, 0
    %p57 = por %p55, %p56
    %p58 = scmp.ne.s32.totalorder %s46, %s47
    %p59 = scmp.eq.s32.totalorder %s16, 1
    %p60 = por %p58, %p59
    %p62 = scmp.ne.s32.totalorder %s47, %s61
    %p63 = scmp.eq.s32.totalorder %s16, 0
    %p64 = por %p62, %p63
    %s66 = sadd.s32 %s65, 1
    %p69 = scmp.eq.s32.totalorder %s10, 1
    %p70 = scmp.ne.s32.totalorder %s65, %s67
    %p71 = scmp.eq.s32.totalorder %s10, 0
    %p72 = por %p70, %p71
    %p73 = scmp.ne.s32.totalorder %s65, %s67
    %p74 = scmp.eq.s32.totalorder %s15, 1
    %p75 = por %p73, %p74
    %p76 = scmp.ne.s32.totalorder %s67, %s68
    %p77 = scmp.eq.s32.totalorder %s15, 0
    %p78 = por %p76, %p77
    %p79 = scmp.ne.s32.totalorder %s67, %s68
    %p80 = scmp.eq.s32.totalorder %s16, 1
    %p81 = por %p79, %p80
    %p83 = scmp.ne.s32.totalorder %s68, %s82
    %p84 = scmp.eq.s32.totalorder %s16, 0
    %p85 = por %p83, %p84
    %s86 = ssub.s32 %s10, %s17
    %p87 = scmp.eq.s32.totalorder %s86, 0
    %s89 = sadd.s32 %s88, 1
    %s90 = scalar_select %p87, %s88, %s89
    %p93 = pneg %p87
    %p94 = scmp.eq.s32.totalorder %s10, 1
    %p95 = por %p93, %p94
    %p96 = scmp.ne.s32.totalorder %s88, %s91
    %p97 = scmp.eq.s32.totalorder %s10, 0
    %p98 = por %p96, %p97
    %p99 = scmp.ne.s32.totalorder %s88, %s91
    %p100 = scmp.eq.s32.totalorder %s15, 1
    %p101 = por %p99, %p100
    %p102 = scmp.ne.s32.totalorder %s91, %s92
    %p103 = scmp.eq.s32.totalorder %s15, 0
    %p104 = por %p102, %p103
    %p105 = scmp.ne.s32.totalorder %s91, %s92
    %p106 = scmp.eq.s32.totalorder %s16, 1
    %p107 = por %p105, %p106
    %p109 = scmp.ne.s32.totalorder %s92, %s108
    %p110 = scmp.eq.s32.totalorder %s16, 0
    %p111 = por %p109, %p110
    %s112 = ssub.s32 %s10, %s17
    %p113 = scmp.eq.s32.totalorder %s112, 0
    %s115 = sadd.s32 %s114, 1
    %s116 = scalar_select %p113, %s114, %s115
    %p119 = pneg %p113
    %p120 = scmp.eq.s32.totalorder %s10, 1
    %p121 = por %p119, %p120
    %p122 = scmp.ne.s32.totalorder %s114, %s117
    %p123 = scmp.eq.s32.totalorder %s10, 0
    %p124 = por %p122, %p123
    %p125 = scmp.ne.s32.totalorder %s114, %s117
    %p126 = scmp.eq.s32.totalorder %s15, 1
    %p127 = por %p125, %p126
    %p128 = scmp.ne.s32.totalorder %s117, %s118
    %p129 = scmp.eq.s32.totalorder %s15, 0
    %p130 = por %p128, %p129
    %p131 = scmp.ne.s32.totalorder %s117, %s118
    %p132 = scmp.eq.s32.totalorder %s16, 1
    %p133 = por %p131, %p132
    %p135 = scmp.ne.s32.totalorder %s118, %s134
    %p136 = scmp.eq.s32.totalorder %s16, 0
    %p137 = por %p135, %p136
    %p138 = scmp.le.s32.totalorder 1, %s10
    %p139 = scmp.lt.s32.totalorder %s10, 3
    %p140 = pnand %p138, %p139
    %p141 = pneg %p140
    // Predicated region
    $region9: #{resblock_forward.7} parent=5 // pred_check
      _
    $region10: #{resblock_forward.7} parent=5 // pred_check_branch
      %143 = sbr.rel (%p140) target = $region12
    $region11: #{resblock_forward.7} parent=5 // pred_region
      %s144 = ssub.s32 %s10, 1
      // Predicated region
      $region13: #{resblock_forward.7} parent=11 // pred_check
        %p145 = pneg %p57
      $region14: #{resblock_forward.7} parent=11 // pred_check_branch
        %147 = sbr.rel (%p145) target = $region16
      $region15: #{resblock_forward.7} parent=11 // pred_region
        _
      $region16: #{resblock_forward.7} parent=11 // pred_fallthru
        _
      // Predicated region
      $region17: #{resblock_forward.7} parent=11 // pred_check
        %p148 = pneg %p78
      $region18: #{resblock_forward.7} parent=11 // pred_check_branch
        %150 = sbr.rel (%p148) target = $region20
      $region19: #{resblock_forward.7} parent=11 // pred_region
        _
      $region20: #{resblock_forward.7} parent=11 // pred_fallthru
        _
    $region12: #{resblock_forward.7} parent=5 // pred_fallthru
      _
    %p151 = scmp.lt.s32.totalorder %s10, 2
    // Predicated region
    $region21: #{resblock_forward.7} parent=5 // pred_check
      %p152 = pneg %p151
    $region22: #{resblock_forward.7} parent=5 // pred_check_branch
      %154 = sbr.rel (%p152) target = $region24
    $region23: #{resblock_forward.7} parent=5 // pred_region
      // Predicated region
      $region25: #{resblock_forward.7} parent=23 // pred_check
        %p155 = pneg %p30
      $region26: #{resblock_forward.7} parent=23 // pred_check_branch
        %157 = sbr.rel (%p155) target = $region28
      $region27: #{resblock_forward.7} parent=23 // pred_region
        %s158 = smul.u32 2, %s10
        %p159 = scmp.lt.s32.totalorder %s158, 3
        %s160 = scalar_select %p159, %s158, 3
        %s161 = smul.addr %s160, 4
        %s162 = smul.addr %s161, 8
        %s163 = scalar_lea.vmem %s0, %s162
        %s164 = smul.u32 2, %s10
      $region28: #{resblock_forward.7} parent=23 // pred_fallthru
        _
      // Predicated region
      $region29: #{resblock_forward.7} parent=23 // pred_check
        %p165 = pneg %p98
      $region30: #{resblock_forward.7} parent=23 // pred_check_branch
        %167 = sbr.rel (%p165) target = $region32
      $region31: #{resblock_forward.7} parent=23 // pred_region
        %s168 = smul.u32 2, %s10
        %p169 = scmp.lt.s32.totalorder %s168, 3
        %s170 = scalar_select %p169, %s168, 3
        %s171 = smul.addr %s170, 4
        %s172 = smul.addr %s171, 8
        %s173 = scalar_lea.vmem %s3, %s172
        %s174 = smul.u32 2, %s10
      $region32: #{resblock_forward.7} parent=23 // pred_fallthru
        _
    $region24: #{resblock_forward.7} parent=5 // pred_fallthru
      _
    %p175 = scmp.le.s32.totalorder 1, %s10
    %p176 = scmp.lt.s32.totalorder %s10, 3
    %p177 = pnand %p175, %p176
    %p178 = pneg %p177
    // Predicated region
    $region33: #{resblock_forward.7} parent=5 // pred_check
      _
    $region34: #{resblock_forward.7} parent=5 // pred_check_branch
      %180 = sbr.rel (%p177) target = $region36
    $region35: #{resblock_forward.7} parent=5 // pred_region
      %s181 = ssub.s32 %s10, 1
      %s182 = smul.u32 2, %s15
      %p183 = scmp.lt.s32.totalorder %s182, 3
      %s184 = scalar_select %p183, %s182, 3
      %s185 = smul.addr %s184, 4
      %s186 = smul.addr %s185, 8
      %s187 = scalar_lea.vmem %s0, %s186
      %p188 = pneg %p36
      %p189 = pneg %p33
      %p190 = pneg %p57
      %p191 = pneg %p54
      %p192 = pneg %p78
      %p193 = pneg %p75
      %s194 = smul.u32 2, %s15
      %p195 = scmp.lt.s32.totalorder %s194, 3
      %s196 = scalar_select %p195, %s194, 3
      %s197 = smul.addr %s196, 4
      %s198 = smul.addr %s197, 8
      %s199 = scalar_lea.vmem %s3, %s198
      %p200 = pneg %p104
      %p201 = pneg %p101
      %p202 = pneg %p130
      %p203 = pneg %p127
      %s204 = smul.u32 2, %s15
      %p205 = scmp.lt.s32.totalorder %s204, 3
      %s206 = scalar_select %p205, %s204, 3
      %s207 = smul.addr %s206, 4
      %s208 = smul.addr %s207, 8
      %s209 = scalar_lea.vmem %s4, %s208
      %s210 = smul.u32 2, %s15
      %p211 = scmp.lt.s32.totalorder %s210, 3
      %s212 = scalar_select %p211, %s210, 3
      %s213 = smul.addr %s212, 4
      %s214 = smul.addr %s213, 8
      %s215 = scalar_lea.vmem %s0, %s214
      %s216 = smul.u32 2, %s15
      %s217 = smul.u32 2, %s15
      %p218 = scmp.lt.s32.totalorder %s217, 3
      %s219 = scalar_select %p218, %s217, 3
      %s220 = smul.addr %s219, 4
      %s221 = smul.addr %s220, 8
      %s222 = scalar_lea.vmem %s3, %s221
      %s223 = smul.u32 2, %s15
      %s224 = smul.u32 2, %s15
      %p225 = scmp.lt.s32.totalorder %s224, 3
      %s226 = scalar_select %p225, %s224, 3
      %s227 = smul.addr %s226, 4
      %s228 = smul.addr %s227, 8
      %s229 = scalar_lea.vmem %s4, %s228
      %s230 = smul.u32 2, %s15
      %v231 = vld [vmem:[%s215] sm:$0xff]
      %v232 = vld [vmem:[%s215 + $0x8] sm:$0xff]
      %v233 = vld [vmem:[%s215 + $0x10] sm:$0xff]
      %v234 = vld [vmem:[%s215 + $0x18] sm:$0xff]
      %v235 = vld [vmem:[%s215 + $0x20] sm:$0xff]
      %v236 = vld [vmem:[%s215 + $0x28] sm:$0xff]
      %v237 = vld [vmem:[%s215 + $0x30] sm:$0xff]
      %v238 = vld [vmem:[%s215 + $0x38] sm:$0xff]
      %v239 = vld [vmem:[%s1] sm:$0xf]
      %v241 = vperm.slane %v239, 0
      %v242 = vperm.slane %v239, 1
      %v243 = vperm.slane %v239, 2
      %v244 = vperm.slane %v239, 3
      %v249 = vmul.f32 %v231, %v241
      %v250 = vmul.f32 %v232, %v242
      %v251 = vmul.f32 %v233, %v243
      %v252 = vmul.f32 %v234, %v244
      %v253 = vmul.f32 %v235, %v241
      %v254 = vmul.f32 %v236, %v242
      %v255 = vmul.f32 %v237, %v243
      %v256 = vmul.f32 %v238, %v244
      %v257 = vld [vmem:[%s2] sm:$0xf]
      %v259 = vperm.slane %v257, 0
      %v260 = vperm.slane %v257, 1
      %v261 = vperm.slane %v257, 2
      %v262 = vperm.slane %v257, 3
      %v267 = vadd.f32 %v249, %v259
      %v268 = vadd.f32 %v250, %v260
      %v269 = vadd.f32 %v251, %v261
      %v270 = vadd.f32 %v252, %v262
      %v271 = vadd.f32 %v253, %v259
      %v272 = vadd.f32 %v254, %v260
      %v273 = vadd.f32 %v255, %v261
      %v274 = vadd.f32 %v256, %v262
      %v275 = vld [vmem:[%s222] sm:$0xff]
      %v276 = vld [vmem:[%s222 + $0x8] sm:$0xff]
      %v277 = vld [vmem:[%s222 + $0x10] sm:$0xff]
      %v278 = vld [vmem:[%s222 + $0x18] sm:$0xff]
      %v279 = vld [vmem:[%s222 + $0x20] sm:$0xff]
      %v280 = vld [vmem:[%s222 + $0x28] sm:$0xff]
      %v281 = vld [vmem:[%s222 + $0x30] sm:$0xff]
      %v282 = vld [vmem:[%s222 + $0x38] sm:$0xff]
      %v283 = vadd.f32 %v267, %v275
      %v284 = vadd.f32 %v268, %v276
      %v285 = vadd.f32 %v269, %v277
      %v286 = vadd.f32 %v270, %v278
      %v287 = vadd.f32 %v271, %v279
      %v288 = vadd.f32 %v272, %v280
      %v289 = vadd.f32 %v273, %v281
      %v290 = vadd.f32 %v274, %v282
      %v291 = vmax.f32 %v283, 0.0
      %v292 = vmax.f32 %v284, 0.0
      %v293 = vmax.f32 %v285, 0.0
      %v294 = vmax.f32 %v286, 0.0
      %v295 = vmax.f32 %v287, 0.0
      %v296 = vmax.f32 %v288, 0.0
      %v297 = vmax.f32 %v289, 0.0
      %v298 = vmax.f32 %v290, 0.0
      %299 = vst [vmem:[%s229] sm:$0xff] %v291
      %300 = vst [vmem:[%s229 + $0x8] sm:$0xff] %v292
      %301 = vst [vmem:[%s229 + $0x10] sm:$0xff] %v293
      %302 = vst [vmem:[%s229 + $0x18] sm:$0xff] %v294
      %303 = vst [vmem:[%s229 + $0x20] sm:$0xff] %v295
      %304 = vst [vmem:[%s229 + $0x28] sm:$0xff] %v296
      %305 = vst [vmem:[%s229 + $0x30] sm:$0xff] %v297
      %306 = vst [vmem:[%s229 + $0x38] sm:$0xff] %v298
      %s307 = smul.u32 2, %s15
      %p308 = scmp.lt.s32.totalorder %s307, 3
      %s309 = scalar_select %p308, %s307, 3
      %s310 = smul.addr %s309, 4
      %s311 = smul.addr %s310, 8
      %s312 = scalar_lea.vmem %s4, %s311
      // Predicated region
      $region37: #{resblock_forward.7} parent=35 // pred_check
        %p313 = pneg %p127
      $region38: #{resblock_forward.7} parent=35 // pred_check_branch
        %315 = sbr.rel (%p313) target = $region40
      $region39: #{resblock_forward.7} parent=35 // pred_region
        %s316 = smul.u32 2, %s15
      $region40: #{resblock_forward.7} parent=35 // pred_fallthru
        _
    $region36: #{resblock_forward.7} parent=5 // pred_fallthru
      _
    %p317 = scmp.le.s32.totalorder 2, %s10
    // Predicated region
    $region41: #{resblock_forward.7} parent=5 // pred_check
      %p318 = pneg %p317
    $region42: #{resblock_forward.7} parent=5 // pred_check_branch
      %320 = sbr.rel (%p318) target = $region44
    $region43: #{resblock_forward.7} parent=5 // pred_region
      %s321 = ssub.s32 %s10, 2
      // Predicated region
      $region45: #{resblock_forward.7} parent=43 // pred_check
        %p322 = pneg %p133
      $region46: #{resblock_forward.7} parent=43 // pred_check_branch
        %324 = sbr.rel (%p322) target = $region48
      $region47: #{resblock_forward.7} parent=43 // pred_region
        %s325 = smul.u32 2, %s16
        %p326 = scmp.lt.s32.totalorder %s325, 3
        %s327 = scalar_select %p326, %s325, 3
        %s328 = smul.addr %s327, 4
        %s329 = smul.addr %s328, 8
        %s330 = scalar_lea.vmem %s4, %s329
      $region48: #{resblock_forward.7} parent=43 // pred_fallthru
        _
    $region44: #{resblock_forward.7} parent=5 // pred_fallthru
      _
  $region6: #{resblock_forward.7} parent=0 // loop_footer
    %s14 = sadd.s32 1, %s10
  $region7: #{resblock_forward.7} parent=0 // loop_footer_branch
    %9 = sbr.rel target = $region3
  $region8: #{resblock_forward.7} parent=0 // loop_exit
    _

</llo_original>
